<compile_context>
chip_gen: v7x
topology: tpu7x:2x2x1
jax: 0.10.0
libtpu: 0.0.40
codegen_flags: <defaults>
</compile_context>

<pallas_src>
import jax
import jax.numpy as jnp
import numpy as np
from jax import lax
from jax.experimental import pallas as pl
from jax.experimental.pallas import tpu as pltpu


def word_lstm_kernel(topic_ref, ids_ref, mask_ref, gate_tab_ref,
                     w_lstm_ref, b_slab_ref, w_lin_ref, out_ref,
                     xw_ref, hid_ref):
    BP, E = topic_ref.shape                 # sublane-padded batch, embed size
    NTOK = ids_ref.shape[0]                 # T * BP, time-major token ids
    V = gate_tab_ref.shape[0]
    H4 = gate_tab_ref.shape[1]
    H = H4 // 4
    T1 = mask_ref.shape[0] // BP            # T + 1 timesteps

    def sigmoid(x):
        # EUP tanh form: keeps the divide off the serial recurrence path
        return 0.5 * jnp.tanh(0.5 * x) + 0.5

    # ---- caption-step gate inputs: one-hot @ (embed @ W_ih^T + b), one bf16 MXU call ----
    ids = ids_ref[...]                                               # (NTOK, 1) int32
    lane = lax.broadcasted_iota(jnp.int32, (NTOK, V), 1)
    onehot = (lane == ids).astype(jnp.bfloat16)                      # exact in bf16
    xw_ref[BP:, :] = jnp.dot(onehot, gate_tab_ref[...],
                             preferred_element_type=jnp.float32)     # (T*BP, 4H)

    # ---- topic step (t=0): raw input projection, bias added in f32 ----
    wih_t = w_lstm_ref[0:E, :]                                       # (E, 4H) bf16
    whh_t = w_lstm_ref[E:E + H, :]                                   # (H, 4H) bf16
    xw_ref[0:BP, :] = (jnp.dot(topic_ref[...].astype(jnp.bfloat16), wih_t,
                               preferred_element_type=jnp.float32)
                       + b_slab_ref[:, 0:H4])

    # ---- fully unrolled recurrence; per-step slice load / aligned (8,128) store ----
    h = jnp.zeros((BP, H), jnp.float32)
    c = jnp.zeros((BP, H), jnp.float32)
    for t in range(T1):                                              # static, unrolled
        g = xw_ref[t * BP:(t + 1) * BP, :] + jnp.dot(
            h.astype(jnp.bfloat16), whh_t,
            preferred_element_type=jnp.float32)                      # (BP, 4H) f32 gates
        i = sigmoid(g[:, 0:H])
        f = sigmoid(g[:, H:2 * H])
        gg = jnp.tanh(g[:, 2 * H:3 * H])
        o = sigmoid(g[:, 3 * H:4 * H])
        c = f * c + i * gg
        h = o * jnp.tanh(c)
        hid_ref[t * BP:(t + 1) * BP, :] = h

    # ---- pack/pad_packed semantics: zero rows past each length (lane-dense mask) ----
    hidden = hid_ref[...] * mask_ref[...]                            # (T1*BP, H) f32

    # ---- vocab projection (bf16 MXU, f32 accumulate); single lane-dense store ----
    out_ref[...] = (jnp.dot(hidden.astype(jnp.bfloat16), w_lin_ref[...],
                            preferred_element_type=jnp.float32)
                    + b_slab_ref[:, H4:H4 + V])


def word_lstm_forward(topic_vec, captions, lengths, params):
    """topic_vec: (B,1,E) f32; captions: (B,T) int; lengths: (B,) int (sorted desc).
    Returns logits (B, T+1, V). Assumes captions are padded to max(lengths)."""
    B, _, E = topic_vec.shape
    T = captions.shape[1]
    T1 = T + 1
    H = params["whh"].shape[1]
    V = params["embed"].shape[0]
    BP = ((B + 7) // 8) * 8                      # sublane-pad the batch to 8
    hp = lax.Precision.HIGHEST

    lens1 = jnp.asarray(lengths, jnp.int32) + 1                     # torch: lengths + 1
    lens1_p = jnp.zeros((BP,), jnp.int32).at[:B].set(lens1)

    topic_p = jnp.zeros((BP, E), jnp.float32).at[:B].set(topic_vec.reshape(B, E))
    ids_p = (jnp.zeros((T, BP), jnp.int32)
             .at[:, :B].set(captions.astype(jnp.int32).T)
             .reshape(T * BP, 1))                                    # time-major ids
    valid = jnp.arange(T1, dtype=jnp.int32)[:, None] < lens1_p[None, :]      # (T1, BP)
    mask = (jnp.broadcast_to(valid[:, :, None], (T1, BP, H))
            .astype(jnp.float32).reshape(T1 * BP, H))                # lane-dense mask

    # ---- parameter-only folds / consolidated slabs (few big DMAs, bf16 MXU operands) ----
    b_lstm = params["b_ih"] + params["b_hh"]
    gate_tab = (jnp.dot(params["embed"], params["wih"].T, precision=hp)
                + b_lstm).astype(jnp.bfloat16)                       # (V, 4H)
    w_lstm_slab = jnp.concatenate([params["wih"].T, params["whh"].T],
                                  axis=0).astype(jnp.bfloat16)       # (E+H, 4H)
    b_slab = jnp.concatenate([b_lstm.reshape(1, 4 * H),
                              params["b_lin"].reshape(1, V)], axis=1)  # (1, 4H+V) f32
    w_lin_t = params["w_lin"].T.astype(jnp.bfloat16)                 # (H, V)

    inputs = (topic_p, ids_p, mask, gate_tab, w_lstm_slab, b_slab, w_lin_t)

    vmem = pl.BlockSpec(memory_space=pltpu.MemorySpace.VMEM)
    logits_tm = pl.pallas_call(
        word_lstm_kernel,
        out_shape=jax.ShapeDtypeStruct((T1 * BP, V), jnp.float32),
        in_specs=[vmem] * len(inputs),
        out_specs=vmem,
        scratch_shapes=[pltpu.VMEM((T1 * BP, 4 * H), jnp.float32),   # xw
                        pltpu.VMEM((T1 * BP, H), jnp.float32)],      # hidden slab
    )(*inputs)

    # (T1*BP, V) time-major -> (B, T+1, V) batch-first, drop batch padding
    return logits_tm.reshape(T1, BP, V)[:, :B, :].transpose(1, 0, 2)


# ---------------- pure-JAX reference (for correctness check) ----------------
def ref_forward(topic_vec, captions, lengths, params):
    B, _, E = topic_vec.shape
    T = captions.shape[1]
    H = params["whh"].shape[1]
    hp = lax.Precision.HIGHEST

    emb = jnp.take(params["embed"], captions, axis=0)              # (B, T, E)
    x = jnp.concatenate([topic_vec, emb], axis=1)                  # (B, T+1, E)

    def sig(z):
        return 1.0 / (1.0 + jnp.exp(-z))

    def step(carry, xt):
        h, c = carry
        gates = (jnp.dot(xt, params["wih"].T, precision=hp) + params["b_ih"]
                 + jnp.dot(h, params["whh"].T, precision=hp) + params["b_hh"])
        i, f, g, o = jnp.split(gates, 4, axis=-1)
        i, f, o = sig(i), sig(f), sig(o)
        g = jnp.tanh(g)
        c = f * c + i * g
        h = o * jnp.tanh(c)
        return (h, c), h

    x_tm = jnp.transpose(x, (1, 0, 2))                             # (T+1, B, E)
    (_, _), hid_tm = lax.scan(step, (jnp.zeros((B, H), jnp.float32),
                                     jnp.zeros((B, H), jnp.float32)), x_tm)
    hidden = jnp.transpose(hid_tm, (1, 0, 2))                      # (B, T+1, H)
    lens1 = jnp.asarray(lengths, jnp.int32) + 1
    mask = (jnp.arange(T + 1)[None, :] < lens1[:, None]).astype(jnp.float32)[..., None]
    hidden = hidden * mask                                         # pad_packed -> zeros
    return jnp.dot(hidden, params["w_lin"].T, precision=hp) + params["b_lin"]


if __name__ == "__main__":
    # embed_size=128, hidden_size=128, vocab_size=256, num_layers=1, batch=2, T=7
    B, T, E, H, V = 2, 7, 128, 128, 256
    key = jax.random.PRNGKey(0)
    keys = jax.random.split(key, 10)
    k_lstm = 1.0 / np.sqrt(H)

    def u(k, shape, a):
        return jax.random.uniform(k, shape, jnp.float32, -a, a)

    params = dict(
        embed=u(keys[0], (V, E), 0.1),            # Embedding.weight ~ U(-0.1, 0.1)
        wih=u(keys[1], (4 * H, E), k_lstm),       # LSTM default init
        whh=u(keys[2], (4 * H, H), k_lstm),
        b_ih=u(keys[3], (4 * H,), k_lstm),
        b_hh=u(keys[4], (4 * H,), k_lstm),
        w_lin=u(keys[5], (V, H), 0.1),            # Linear.weight ~ U(-0.1, 0.1)
        b_lin=jnp.zeros((V,), jnp.float32),       # Linear.bias = 0
    )

    topic_vec = jax.random.normal(keys[6], (B, 1, E), jnp.float32)
    captions = jax.random.randint(keys[7], (B, T), 0, V, jnp.int32)
    lengths = jnp.array([T, 4], jnp.int32)        # sorted descending; +1 inside forward

    out = jax.block_until_ready(
        jax.jit(word_lstm_forward)(topic_vec, captions, lengths, params))
    ref = ref_forward(topic_vec, captions, lengths, params)

    assert out.shape == (B, T + 1, V)
    # tolerance loosened from 2e-3 to 5e-3 to accommodate bf16 MXU operands
    # (review item: bf16 cast acknowledged as a numerics change; f32 accumulation kept)
    np.testing.assert_allclose(np.asarray(out), np.asarray(ref), atol=5e-3, rtol=5e-3)
    print("KERNEL_OK")
</pallas_src>

<mosaic_0001>
module attributes {stable_mosaic.version = 11 : i64} {
  func.func @word_lstm_kernel(%arg0: memref<8x128xf32, #tpu.memory_space<vmem>>, %arg1: memref<56x1xi32, #tpu.memory_space<vmem>>, %arg2: memref<64x128xf32, #tpu.memory_space<vmem>>, %arg3: memref<256x512xbf16, #tpu.memory_space<vmem>>, %arg4: memref<256x512xbf16, #tpu.memory_space<vmem>>, %arg5: memref<1x768xf32, #tpu.memory_space<vmem>>, %arg6: memref<128x256xbf16, #tpu.memory_space<vmem>>, %arg7: memref<64x256xf32, #tpu.memory_space<vmem>>, %arg8: memref<64x512xf32, #tpu.memory_space<vmem>>, %arg9: memref<64x128xf32, #tpu.memory_space<vmem>>) attributes {dimension_semantics = [], scalar_prefetch = 0 : i64, scratch_operands = 2 : i64, tpu.core_type = #tpu.core_type<tc>} {
    %c0 = arith.constant 0 : index
    %c0_0 = arith.constant 0 : index
    %0 = vector.load %arg1[%c0, %c0_0] : memref<56x1xi32, #tpu.memory_space<vmem>>, vector<56x1xi32>
    %1 = tpu.iota {dimensions = array<i32: 1>} : vector<56x256xi32>
    %2 = vector.broadcast %0 : vector<56x1xi32> to vector<56x256xi32>
    %3 = arith.cmpi eq, %1, %2 : vector<56x256xi32>
    %4 = arith.extui %3 : vector<56x256xi1> to vector<56x256xi32>
    %5 = arith.sitofp %4 : vector<56x256xi32> to vector<56x256xf32>
    %6 = arith.truncf %5 : vector<56x256xf32> to vector<56x256xbf16>
    %c0_1 = arith.constant 0 : index
    %c0_2 = arith.constant 0 : index
    %7 = vector.load %arg3[%c0_1, %c0_2] : memref<256x512xbf16, #tpu.memory_space<vmem>>, vector<256x512xbf16>
    %cst = arith.constant dense<0.000000e+00> : vector<56x512xf32>
    %8 = tpu.matmul %6, %7, %cst {dimension_numbers = #tpu.dot_dimension_numbers<[1], [0], [0], [1], [0, 0, 1, 1], [], []>} : vector<56x256xbf16>, vector<256x512xbf16>, vector<56x512xf32> -> vector<56x512xf32>
    %c8 = arith.constant 8 : index
    %c0_3 = arith.constant 0 : index
    %9 = vector.load %arg8[%c8, %c0_3] : memref<64x512xf32, #tpu.memory_space<vmem>>, vector<56x512xf32>
    tpu.vector_store %arg8[%c8, %c0_3], %8 {strides = array<i32>} : memref<64x512xf32, #tpu.memory_space<vmem>>, vector<56x512xf32>,
    %c0_4 = arith.constant 0 : index
    %c0_5 = arith.constant 0 : index
    %10 = vector.load %arg4[%c0_4, %c0_5] : memref<256x512xbf16, #tpu.memory_space<vmem>>, vector<128x512xbf16>
    %c128 = arith.constant 128 : index
    %c0_6 = arith.constant 0 : index
    %11 = vector.load %arg4[%c128, %c0_6] : memref<256x512xbf16, #tpu.memory_space<vmem>>, vector<128x512xbf16>
    %c0_7 = arith.constant 0 : index
    %c0_8 = arith.constant 0 : index
    %12 = vector.load %arg0[%c0_7, %c0_8] : memref<8x128xf32, #tpu.memory_space<vmem>>, vector<8x128xf32>
    %13 = arith.truncf %12 : vector<8x128xf32> to vector<8x128xbf16>
    %cst_9 = arith.constant dense<0.000000e+00> : vector<8x512xf32>
    %14 = tpu.matmul %13, %10, %cst_9 {dimension_numbers = #tpu.dot_dimension_numbers<[1], [0], [0], [1], [0, 0, 1, 1], [], []>} : vector<8x128xbf16>, vector<128x512xbf16>, vector<8x512xf32> -> vector<8x512xf32>
    %c0_10 = arith.constant 0 : index
    %c0_11 = arith.constant 0 : index
    %15 = vector.load %arg5[%c0_10, %c0_11] : memref<1x768xf32, #tpu.memory_space<vmem>>, vector<1x512xf32>
    %16 = vector.broadcast %15 : vector<1x512xf32> to vector<8x512xf32>
    %17 = arith.addf %14, %16 : vector<8x512xf32>
    %c0_12 = arith.constant 0 : index
    %c0_13 = arith.constant 0 : index
    %18 = vector.load %arg8[%c0_12, %c0_13] : memref<64x512xf32, #tpu.memory_space<vmem>>, vector<8x512xf32>
    tpu.vector_store %arg8[%c0_12, %c0_13], %17 {strides = array<i32>} : memref<64x512xf32, #tpu.memory_space<vmem>>, vector<8x512xf32>,
    %cst_14 = arith.constant 0.000000e+00 : f32
    %19 = vector.broadcast %cst_14 : f32 to vector<8x128xf32>
    %cst_15 = arith.constant 0.000000e+00 : f32
    %20 = vector.broadcast %cst_15 : f32 to vector<8x128xf32>
    %c0_16 = arith.constant 0 : index
    %c0_17 = arith.constant 0 : index
    %21 = vector.load %arg8[%c0_16, %c0_17] : memref<64x512xf32, #tpu.memory_space<vmem>>, vector<8x512xf32>
    %22 = arith.truncf %19 : vector<8x128xf32> to vector<8x128xbf16>
    %cst_18 = arith.constant dense<0.000000e+00> : vector<8x512xf32>
    %23 = tpu.matmul %22, %11, %cst_18 {dimension_numbers = #tpu.dot_dimension_numbers<[1], [0], [0], [1], [0, 0, 1, 1], [], []>} : vector<8x128xbf16>, vector<128x512xbf16>, vector<8x512xf32> -> vector<8x512xf32>
    %24 = arith.addf %21, %23 : vector<8x512xf32>
    %25 = vector.extract_strided_slice %24 {offsets = [0, 0], sizes = [8, 128], strides = [1, 1]} : vector<8x512xf32> to vector<8x128xf32>
    %cst_19 = arith.constant 5.000000e-01 : f32
    %26 = vector.broadcast %cst_19 : f32 to vector<8x128xf32>
    %27 = arith.mulf %26, %25 : vector<8x128xf32>
    %28 = math.tanh %27 : vector<8x128xf32>
    %cst_20 = arith.constant 5.000000e-01 : f32
    %29 = vector.broadcast %cst_20 : f32 to vector<8x128xf32>
    %30 = arith.mulf %29, %28 : vector<8x128xf32>
    %cst_21 = arith.constant 5.000000e-01 : f32
    %31 = vector.broadcast %cst_21 : f32 to vector<8x128xf32>
    %32 = arith.addf %30, %31 : vector<8x128xf32>
    %33 = vector.extract_strided_slice %24 {offsets = [0, 128], sizes = [8, 128], strides = [1, 1]} : vector<8x512xf32> to vector<8x128xf32>
    %cst_22 = arith.constant 5.000000e-01 : f32
    %34 = vector.broadcast %cst_22 : f32 to vector<8x128xf32>
    %35 = arith.mulf %34, %33 : vector<8x128xf32>
    %36 = math.tanh %35 : vector<8x128xf32>
    %cst_23 = arith.constant 5.000000e-01 : f32
    %37 = vector.broadcast %cst_23 : f32 to vector<8x128xf32>
    %38 = arith.mulf %37, %36 : vector<8x128xf32>
    %cst_24 = arith.constant 5.000000e-01 : f32
    %39 = vector.broadcast %cst_24 : f32 to vector<8x128xf32>
    %40 = arith.addf %38, %39 : vector<8x128xf32>
    %41 = vector.extract_strided_slice %24 {offsets = [0, 256], sizes = [8, 128], strides = [1, 1]} : vector<8x512xf32> to vector<8x128xf32>
    %42 = math.tanh %41 : vector<8x128xf32>
    %43 = vector.extract_strided_slice %24 {offsets = [0, 384], sizes = [8, 128], strides = [1, 1]} : vector<8x512xf32> to vector<8x128xf32>
    %cst_25 = arith.constant 5.000000e-01 : f32
    %44 = vector.broadcast %cst_25 : f32 to vector<8x128xf32>
    %45 = arith.mulf %44, %43 : vector<8x128xf32>
    %46 = math.tanh %45 : vector<8x128xf32>
    %cst_26 = arith.constant 5.000000e-01 : f32
    %47 = vector.broadcast %cst_26 : f32 to vector<8x128xf32>
    %48 = arith.mulf %47, %46 : vector<8x128xf32>
    %cst_27 = arith.constant 5.000000e-01 : f32
    %49 = vector.broadcast %cst_27 : f32 to vector<8x128xf32>
    %50 = arith.addf %48, %49 : vector<8x128xf32>
    %51 = arith.mulf %40, %20 : vector<8x128xf32>
    %52 = arith.mulf %32, %42 : vector<8x128xf32>
    %53 = arith.addf %51, %52 : vector<8x128xf32>
    %54 = math.tanh %53 : vector<8x128xf32>
    %55 = arith.mulf %50, %54 : vector<8x128xf32>
    %c0_28 = arith.constant 0 : index
    %c0_29 = arith.constant 0 : index
    %56 = vector.load %arg9[%c0_28, %c0_29] : memref<64x128xf32, #tpu.memory_space<vmem>>, vector<8x128xf32>
    tpu.vector_store %arg9[%c0_28, %c0_29], %55 {strides = array<i32>} : memref<64x128xf32, #tpu.memory_space<vmem>>, vector<8x128xf32>,
    %c8_30 = arith.constant 8 : index
    %c0_31 = arith.constant 0 : index
    %57 = vector.load %arg8[%c8_30, %c0_31] : memref<64x512xf32, #tpu.memory_space<vmem>>, vector<8x512xf32>
    %58 = arith.truncf %55 : vector<8x128xf32> to vector<8x128xbf16>
    %cst_32 = arith.constant dense<0.000000e+00> : vector<8x512xf32>
    %59 = tpu.matmul %58, %11, %cst_32 {dimension_numbers = #tpu.dot_dimension_numbers<[1], [0], [0], [1], [0, 0, 1, 1], [], []>} : vector<8x128xbf16>, vector<128x512xbf16>, vector<8x512xf32> -> vector<8x512xf32>
    %60 = arith.addf %57, %59 : vector<8x512xf32>
    %61 = vector.extract_strided_slice %60 {offsets = [0, 0], sizes = [8, 128], strides = [1, 1]} : vector<8x512xf32> to vector<8x128xf32>
    %cst_33 = arith.constant 5.000000e-01 : f32
    %62 = vector.broadcast %cst_33 : f32 to vector<8x128xf32>
    %63 = arith.mulf %62, %61 : vector<8x128xf32>
    %64 = math.tanh %63 : vector<8x128xf32>
    %cst_34 = arith.constant 5.000000e-01 : f32
    %65 = vector.broadcast %cst_34 : f32 to vector<8x128xf32>
    %66 = arith.mulf %65, %64 : vector<8x128xf32>
    %cst_35 = arith.constant 5.000000e-01 : f32
    %67 = vector.broadcast %cst_35 : f32 to vector<8x128xf32>
    %68 = arith.addf %66, %67 : vector<8x128xf32>
    %69 = vector.extract_strided_slice %60 {offsets = [0, 128], sizes = [8, 128], strides = [1, 1]} : vector<8x512xf32> to vector<8x128xf32>
    %cst_36 = arith.constant 5.000000e-01 : f32
    %70 = vector.broadcast %cst_36 : f32 to vector<8x128xf32>
    %71 = arith.mulf %70, %69 : vector<8x128xf32>
    %72 = math.tanh %71 : vector<8x128xf32>
    %cst_37 = arith.constant 5.000000e-01 : f32
    %73 = vector.broadcast %cst_37 : f32 to vector<8x128xf32>
    %74 = arith.mulf %73, %72 : vector<8x128xf32>
    %cst_38 = arith.constant 5.000000e-01 : f32
    %75 = vector.broadcast %cst_38 : f32 to vector<8x128xf32>
    %76 = arith.addf %74, %75 : vector<8x128xf32>
    %77 = vector.extract_strided_slice %60 {offsets = [0, 256], sizes = [8, 128], strides = [1, 1]} : vector<8x512xf32> to vector<8x128xf32>
    %78 = math.tanh %77 : vector<8x128xf32>
    %79 = vector.extract_strided_slice %60 {offsets = [0, 384], sizes = [8, 128], strides = [1, 1]} : vector<8x512xf32> to vector<8x128xf32>
    %cst_39 = arith.constant 5.000000e-01 : f32
    %80 = vector.broadcast %cst_39 : f32 to vector<8x128xf32>
    %81 = arith.mulf %80, %79 : vector<8x128xf32>
    %82 = math.tanh %81 : vector<8x128xf32>
    %cst_40 = arith.constant 5.000000e-01 : f32
    %83 = vector.broadcast %cst_40 : f32 to vector<8x128xf32>
    %84 = arith.mulf %83, %82 : vector<8x128xf32>
    %cst_41 = arith.constant 5.000000e-01 : f32
    %85 = vector.broadcast %cst_41 : f32 to vector<8x128xf32>
    %86 = arith.addf %84, %85 : vector<8x128xf32>
    %87 = arith.mulf %76, %53 : vector<8x128xf32>
    %88 = arith.mulf %68, %78 : vector<8x128xf32>
    %89 = arith.addf %87, %88 : vector<8x128xf32>
    %90 = math.tanh %89 : vector<8x128xf32>
    %91 = arith.mulf %86, %90 : vector<8x128xf32>
    %c8_42 = arith.constant 8 : index
    %c0_43 = arith.constant 0 : index
    %92 = vector.load %arg9[%c8_42, %c0_43] : memref<64x128xf32, #tpu.memory_space<vmem>>, vector<8x128xf32>
    tpu.vector_store %arg9[%c8_42, %c0_43], %91 {strides = array<i32>} : memref<64x128xf32, #tpu.memory_space<vmem>>, vector<8x128xf32>,
    %c16 = arith.constant 16 : index
    %c0_44 = arith.constant 0 : index
    %93 = vector.load %arg8[%c16, %c0_44] : memref<64x512xf32, #tpu.memory_space<vmem>>, vector<8x512xf32>
    %94 = arith.truncf %91 : vector<8x128xf32> to vector<8x128xbf16>
    %cst_45 = arith.constant dense<0.000000e+00> : vector<8x512xf32>
    %95 = tpu.matmul %94, %11, %cst_45 {dimension_numbers = #tpu.dot_dimension_numbers<[1], [0], [0], [1], [0, 0, 1, 1], [], []>} : vector<8x128xbf16>, vector<128x512xbf16>, vector<8x512xf32> -> vector<8x512xf32>
    %96 = arith.addf %93, %95 : vector<8x512xf32>
    %97 = vector.extract_strided_slice %96 {offsets = [0, 0], sizes = [8, 128], strides = [1, 1]} : vector<8x512xf32> to vector<8x128xf32>
    %cst_46 = arith.constant 5.000000e-01 : f32
    %98 = vector.broadcast %cst_46 : f32 to vector<8x128xf32>
    %99 = arith.mulf %98, %97 : vector<8x128xf32>
    %100 = math.tanh %99 : vector<8x128xf32>
    %cst_47 = arith.constant 5.000000e-01 : f32
    %101 = vector.broadcast %cst_47 : f32 to vector<8x128xf32>
    %102 = arith.mulf %101, %100 : vector<8x128xf32>
    %cst_48 = arith.constant 5.000000e-01 : f32
    %103 = vector.broadcast %cst_48 : f32 to vector<8x128xf32>
    %104 = arith.addf %102, %103 : vector<8x128xf32>
    %105 = vector.extract_strided_slice %96 {offsets = [0, 128], sizes = [8, 128], strides = [1, 1]} : vector<8x512xf32> to vector<8x128xf32>
    %cst_49 = arith.constant 5.000000e-01 : f32
    %106 = vector.broadcast %cst_49 : f32 to vector<8x128xf32>
    %107 = arith.mulf %106, %105 : vector<8x128xf32>
    %108 = math.tanh %107 : vector<8x128xf32>
    %cst_50 = arith.constant 5.000000e-01 : f32
    %109 = vector.broadcast %cst_50 : f32 to vector<8x128xf32>
    %110 = arith.mulf %109, %108 : vector<8x128xf32>
    %cst_51 = arith.constant 5.000000e-01 : f32
    %111 = vector.broadcast %cst_51 : f32 to vector<8x128xf32>
    %112 = arith.addf %110, %111 : vector<8x128xf32>
    %113 = vector.extract_strided_slice %96 {offsets = [0, 256], sizes = [8, 128], strides = [1, 1]} : vector<8x512xf32> to vector<8x128xf32>
    %114 = math.tanh %113 : vector<8x128xf32>
    %115 = vector.extract_strided_slice %96 {offsets = [0, 384], sizes = [8, 128], strides = [1, 1]} : vector<8x512xf32> to vector<8x128xf32>
    %cst_52 = arith.constant 5.000000e-01 : f32
    %116 = vector.broadcast %cst_52 : f32 to vector<8x128xf32>
    %117 = arith.mulf %116, %115 : vector<8x128xf32>
    %118 = math.tanh %117 : vector<8x128xf32>
    %cst_53 = arith.constant 5.000000e-01 : f32
    %119 = vector.broadcast %cst_53 : f32 to vector<8x128xf32>
    %120 = arith.mulf %119, %118 : vector<8x128xf32>
    %cst_54 = arith.constant 5.000000e-01 : f32
    %121 = vector.broadcast %cst_54 : f32 to vector<8x128xf32>
    %122 = arith.addf %120, %121 : vector<8x128xf32>
    %123 = arith.mulf %112, %89 : vector<8x128xf32>
    %124 = arith.mulf %104, %114 : vector<8x128xf32>
    %125 = arith.addf %123, %124 : vector<8x128xf32>
    %126 = math.tanh %125 : vector<8x128xf32>
    %127 = arith.mulf %122, %126 : vector<8x128xf32>
    %c16_55 = arith.constant 16 : index
    %c0_56 = arith.constant 0 : index
    %128 = vector.load %arg9[%c16_55, %c0_56] : memref<64x128xf32, #tpu.memory_space<vmem>>, vector<8x128xf32>
    tpu.vector_store %arg9[%c16_55, %c0_56], %127 {strides = array<i32>} : memref<64x128xf32, #tpu.memory_space<vmem>>, vector<8x128xf32>,
    %c24 = arith.constant 24 : index
    %c0_57 = arith.constant 0 : index
    %129 = vector.load %arg8[%c24, %c0_57] : memref<64x512xf32, #tpu.memory_space<vmem>>, vector<8x512xf32>
    %130 = arith.truncf %127 : vector<8x128xf32> to vector<8x128xbf16>
    %cst_58 = arith.constant dense<0.000000e+00> : vector<8x512xf32>
    %131 = tpu.matmul %130, %11, %cst_58 {dimension_numbers = #tpu.dot_dimension_numbers<[1], [0], [0], [1], [0, 0, 1, 1], [], []>} : vector<8x128xbf16>, vector<128x512xbf16>, vector<8x512xf32> -> vector<8x512xf32>
    %132 = arith.addf %129, %131 : vector<8x512xf32>
    %133 = vector.extract_strided_slice %132 {offsets = [0, 0], sizes = [8, 128], strides = [1, 1]} : vector<8x512xf32> to vector<8x128xf32>
    %cst_59 = arith.constant 5.000000e-01 : f32
    %134 = vector.broadcast %cst_59 : f32 to vector<8x128xf32>
    %135 = arith.mulf %134, %133 : vector<8x128xf32>
    %136 = math.tanh %135 : vector<8x128xf32>
    %cst_60 = arith.constant 5.000000e-01 : f32
    %137 = vector.broadcast %cst_60 : f32 to vector<8x128xf32>
    %138 = arith.mulf %137, %136 : vector<8x128xf32>
    %cst_61 = arith.constant 5.000000e-01 : f32
    %139 = vector.broadcast %cst_61 : f32 to vector<8x128xf32>
    %140 = arith.addf %138, %139 : vector<8x128xf32>
    %141 = vector.extract_strided_slice %132 {offsets = [0, 128], sizes = [8, 128], strides = [1, 1]} : vector<8x512xf32> to vector<8x128xf32>
    %cst_62 = arith.constant 5.000000e-01 : f32
    %142 = vector.broadcast %cst_62 : f32 to vector<8x128xf32>
    %143 = arith.mulf %142, %141 : vector<8x128xf32>
    %144 = math.tanh %143 : vector<8x128xf32>
    %cst_63 = arith.constant 5.000000e-01 : f32
    %145 = vector.broadcast %cst_63 : f32 to vector<8x128xf32>
    %146 = arith.mulf %145, %144 : vector<8x128xf32>
    %cst_64 = arith.constant 5.000000e-01 : f32
    %147 = vector.broadcast %cst_64 : f32 to vector<8x128xf32>
    %148 = arith.addf %146, %147 : vector<8x128xf32>
    %149 = vector.extract_strided_slice %132 {offsets = [0, 256], sizes = [8, 128], strides = [1, 1]} : vector<8x512xf32> to vector<8x128xf32>
    %150 = math.tanh %149 : vector<8x128xf32>
    %151 = vector.extract_strided_slice %132 {offsets = [0, 384], sizes = [8, 128], strides = [1, 1]} : vector<8x512xf32> to vector<8x128xf32>
    %cst_65 = arith.constant 5.000000e-01 : f32
    %152 = vector.broadcast %cst_65 : f32 to vector<8x128xf32>
    %153 = arith.mulf %152, %151 : vector<8x128xf32>
    %154 = math.tanh %153 : vector<8x128xf32>
    %cst_66 = arith.constant 5.000000e-01 : f32
    %155 = vector.broadcast %cst_66 : f32 to vector<8x128xf32>
    %156 = arith.mulf %155, %154 : vector<8x128xf32>
    %cst_67 = arith.constant 5.000000e-01 : f32
    %157 = vector.broadcast %cst_67 : f32 to vector<8x128xf32>
    %158 = arith.addf %156, %157 : vector<8x128xf32>
    %159 = arith.mulf %148, %125 : vector<8x128xf32>
    %160 = arith.mulf %140, %150 : vector<8x128xf32>
    %161 = arith.addf %159, %160 : vector<8x128xf32>
    %162 = math.tanh %161 : vector<8x128xf32>
    %163 = arith.mulf %158, %162 : vector<8x128xf32>
    %c24_68 = arith.constant 24 : index
    %c0_69 = arith.constant 0 : index
    %164 = vector.load %arg9[%c24_68, %c0_69] : memref<64x128xf32, #tpu.memory_space<vmem>>, vector<8x128xf32>
    tpu.vector_store %arg9[%c24_68, %c0_69], %163 {strides = array<i32>} : memref<64x128xf32, #tpu.memory_space<vmem>>, vector<8x128xf32>,
    %c32 = arith.constant 32 : index
    %c0_70 = arith.constant 0 : index
    %165 = vector.load %arg8[%c32, %c0_70] : memref<64x512xf32, #tpu.memory_space<vmem>>, vector<8x512xf32>
    %166 = arith.truncf %163 : vector<8x128xf32> to vector<8x128xbf16>
    %cst_71 = arith.constant dense<0.000000e+00> : vector<8x512xf32>
    %167 = tpu.matmul %166, %11, %cst_71 {dimension_numbers = #tpu.dot_dimension_numbers<[1], [0], [0], [1], [0, 0, 1, 1], [], []>} : vector<8x128xbf16>, vector<128x512xbf16>, vector<8x512xf32> -> vector<8x512xf32>
    %168 = arith.addf %165, %167 : vector<8x512xf32>
    %169 = vector.extract_strided_slice %168 {offsets = [0, 0], sizes = [8, 128], strides = [1, 1]} : vector<8x512xf32> to vector<8x128xf32>
    %cst_72 = arith.constant 5.000000e-01 : f32
    %170 = vector.broadcast %cst_72 : f32 to vector<8x128xf32>
    %171 = arith.mulf %170, %169 : vector<8x128xf32>
    %172 = math.tanh %171 : vector<8x128xf32>
    %cst_73 = arith.constant 5.000000e-01 : f32
    %173 = vector.broadcast %cst_73 : f32 to vector<8x128xf32>
    %174 = arith.mulf %173, %172 : vector<8x128xf32>
    %cst_74 = arith.constant 5.000000e-01 : f32
    %175 = vector.broadcast %cst_74 : f32 to vector<8x128xf32>
    %176 = arith.addf %174, %175 : vector<8x128xf32>
    %177 = vector.extract_strided_slice %168 {offsets = [0, 128], sizes = [8, 128], strides = [1, 1]} : vector<8x512xf32> to vector<8x128xf32>
    %cst_75 = arith.constant 5.000000e-01 : f32
    %178 = vector.broadcast %cst_75 : f32 to vector<8x128xf32>
    %179 = arith.mulf %178, %177 : vector<8x128xf32>
    %180 = math.tanh %179 : vector<8x128xf32>
    %cst_76 = arith.constant 5.000000e-01 : f32
    %181 = vector.broadcast %cst_76 : f32 to vector<8x128xf32>
    %182 = arith.mulf %181, %180 : vector<8x128xf32>
    %cst_77 = arith.constant 5.000000e-01 : f32
    %183 = vector.broadcast %cst_77 : f32 to vector<8x128xf32>
    %184 = arith.addf %182, %183 : vector<8x128xf32>
    %185 = vector.extract_strided_slice %168 {offsets = [0, 256], sizes = [8, 128], strides = [1, 1]} : vector<8x512xf32> to vector<8x128xf32>
    %186 = math.tanh %185 : vector<8x128xf32>
    %187 = vector.extract_strided_slice %168 {offsets = [0, 384], sizes = [8, 128], strides = [1, 1]} : vector<8x512xf32> to vector<8x128xf32>
    %cst_78 = arith.constant 5.000000e-01 : f32
    %188 = vector.broadcast %cst_78 : f32 to vector<8x128xf32>
    %189 = arith.mulf %188, %187 : vector<8x128xf32>
    %190 = math.tanh %189 : vector<8x128xf32>
    %cst_79 = arith.constant 5.000000e-01 : f32
    %191 = vector.broadcast %cst_79 : f32 to vector<8x128xf32>
    %192 = arith.mulf %191, %190 : vector<8x128xf32>
    %cst_80 = arith.constant 5.000000e-01 : f32
    %193 = vector.broadcast %cst_80 : f32 to vector<8x128xf32>
    %194 = arith.addf %192, %193 : vector<8x128xf32>
    %195 = arith.mulf %184, %161 : vector<8x128xf32>
    %196 = arith.mulf %176, %186 : vector<8x128xf32>
    %197 = arith.addf %195, %196 : vector<8x128xf32>
    %198 = math.tanh %197 : vector<8x128xf32>
    %199 = arith.mulf %194, %198 : vector<8x128xf32>
    %c32_81 = arith.constant 32 : index
    %c0_82 = arith.constant 0 : index
    %200 = vector.load %arg9[%c32_81, %c0_82] : memref<64x128xf32, #tpu.memory_space<vmem>>, vector<8x128xf32>
    tpu.vector_store %arg9[%c32_81, %c0_82], %199 {strides = array<i32>} : memref<64x128xf32, #tpu.memory_space<vmem>>, vector<8x128xf32>,
    %c40 = arith.constant 40 : index
    %c0_83 = arith.constant 0 : index
    %201 = vector.load %arg8[%c40, %c0_83] : memref<64x512xf32, #tpu.memory_space<vmem>>, vector<8x512xf32>
    %202 = arith.truncf %199 : vector<8x128xf32> to vector<8x128xbf16>
    %cst_84 = arith.constant dense<0.000000e+00> : vector<8x512xf32>
    %203 = tpu.matmul %202, %11, %cst_84 {dimension_numbers = #tpu.dot_dimension_numbers<[1], [0], [0], [1], [0, 0, 1, 1], [], []>} : vector<8x128xbf16>, vector<128x512xbf16>, vector<8x512xf32> -> vector<8x512xf32>
    %204 = arith.addf %201, %203 : vector<8x512xf32>
    %205 = vector.extract_strided_slice %204 {offsets = [0, 0], sizes = [8, 128], strides = [1, 1]} : vector<8x512xf32> to vector<8x128xf32>
    %cst_85 = arith.constant 5.000000e-01 : f32
    %206 = vector.broadcast %cst_85 : f32 to vector<8x128xf32>
    %207 = arith.mulf %206, %205 : vector<8x128xf32>
    %208 = math.tanh %207 : vector<8x128xf32>
    %cst_86 = arith.constant 5.000000e-01 : f32
    %209 = vector.broadcast %cst_86 : f32 to vector<8x128xf32>
    %210 = arith.mulf %209, %208 : vector<8x128xf32>
    %cst_87 = arith.constant 5.000000e-01 : f32
    %211 = vector.broadcast %cst_87 : f32 to vector<8x128xf32>
    %212 = arith.addf %210, %211 : vector<8x128xf32>
    %213 = vector.extract_strided_slice %204 {offsets = [0, 128], sizes = [8, 128], strides = [1, 1]} : vector<8x512xf32> to vector<8x128xf32>
    %cst_88 = arith.constant 5.000000e-01 : f32
    %214 = vector.broadcast %cst_88 : f32 to vector<8x128xf32>
    %215 = arith.mulf %214, %213 : vector<8x128xf32>
    %216 = math.tanh %215 : vector<8x128xf32>
    %cst_89 = arith.constant 5.000000e-01 : f32
    %217 = vector.broadcast %cst_89 : f32 to vector<8x128xf32>
    %218 = arith.mulf %217, %216 : vector<8x128xf32>
    %cst_90 = arith.constant 5.000000e-01 : f32
    %219 = vector.broadcast %cst_90 : f32 to vector<8x128xf32>
    %220 = arith.addf %218, %219 : vector<8x128xf32>
    %221 = vector.extract_strided_slice %204 {offsets = [0, 256], sizes = [8, 128], strides = [1, 1]} : vector<8x512xf32> to vector<8x128xf32>
    %222 = math.tanh %221 : vector<8x128xf32>
    %223 = vector.extract_strided_slice %204 {offsets = [0, 384], sizes = [8, 128], strides = [1, 1]} : vector<8x512xf32> to vector<8x128xf32>
    %cst_91 = arith.constant 5.000000e-01 : f32
    %224 = vector.broadcast %cst_91 : f32 to vector<8x128xf32>
    %225 = arith.mulf %224, %223 : vector<8x128xf32>
    %226 = math.tanh %225 : vector<8x128xf32>
    %cst_92 = arith.constant 5.000000e-01 : f32
    %227 = vector.broadcast %cst_92 : f32 to vector<8x128xf32>
    %228 = arith.mulf %227, %226 : vector<8x128xf32>
    %cst_93 = arith.constant 5.000000e-01 : f32
    %229 = vector.broadcast %cst_93 : f32 to vector<8x128xf32>
    %230 = arith.addf %228, %229 : vector<8x128xf32>
    %231 = arith.mulf %220, %197 : vector<8x128xf32>
    %232 = arith.mulf %212, %222 : vector<8x128xf32>
    %233 = arith.addf %231, %232 : vector<8x128xf32>
    %234 = math.tanh %233 : vector<8x128xf32>
    %235 = arith.mulf %230, %234 : vector<8x128xf32>
    %c40_94 = arith.constant 40 : index
    %c0_95 = arith.constant 0 : index
    %236 = vector.load %arg9[%c40_94, %c0_95] : memref<64x128xf32, #tpu.memory_space<vmem>>, vector<8x128xf32>
    tpu.vector_store %arg9[%c40_94, %c0_95], %235 {strides = array<i32>} : memref<64x128xf32, #tpu.memory_space<vmem>>, vector<8x128xf32>,
    %c48 = arith.constant 48 : index
    %c0_96 = arith.constant 0 : index
    %237 = vector.load %arg8[%c48, %c0_96] : memref<64x512xf32, #tpu.memory_space<vmem>>, vector<8x512xf32>
    %238 = arith.truncf %235 : vector<8x128xf32> to vector<8x128xbf16>
    %cst_97 = arith.constant dense<0.000000e+00> : vector<8x512xf32>
    %239 = tpu.matmul %238, %11, %cst_97 {dimension_numbers = #tpu.dot_dimension_numbers<[1], [0], [0], [1], [0, 0, 1, 1], [], []>} : vector<8x128xbf16>, vector<128x512xbf16>, vector<8x512xf32> -> vector<8x512xf32>
    %240 = arith.addf %237, %239 : vector<8x512xf32>
    %241 = vector.extract_strided_slice %240 {offsets = [0, 0], sizes = [8, 128], strides = [1, 1]} : vector<8x512xf32> to vector<8x128xf32>
    %cst_98 = arith.constant 5.000000e-01 : f32
    %242 = vector.broadcast %cst_98 : f32 to vector<8x128xf32>
    %243 = arith.mulf %242, %241 : vector<8x128xf32>
    %244 = math.tanh %243 : vector<8x128xf32>
    %cst_99 = arith.constant 5.000000e-01 : f32
    %245 = vector.broadcast %cst_99 : f32 to vector<8x128xf32>
    %246 = arith.mulf %245, %244 : vector<8x128xf32>
    %cst_100 = arith.constant 5.000000e-01 : f32
    %247 = vector.broadcast %cst_100 : f32 to vector<8x128xf32>
    %248 = arith.addf %246, %247 : vector<8x128xf32>
    %249 = vector.extract_strided_slice %240 {offsets = [0, 128], sizes = [8, 128], strides = [1, 1]} : vector<8x512xf32> to vector<8x128xf32>
    %cst_101 = arith.constant 5.000000e-01 : f32
    %250 = vector.broadcast %cst_101 : f32 to vector<8x128xf32>
    %251 = arith.mulf %250, %249 : vector<8x128xf32>
    %252 = math.tanh %251 : vector<8x128xf32>
    %cst_102 = arith.constant 5.000000e-01 : f32
    %253 = vector.broadcast %cst_102 : f32 to vector<8x128xf32>
    %254 = arith.mulf %253, %252 : vector<8x128xf32>
    %cst_103 = arith.constant 5.000000e-01 : f32
    %255 = vector.broadcast %cst_103 : f32 to vector<8x128xf32>
    %256 = arith.addf %254, %255 : vector<8x128xf32>
    %257 = vector.extract_strided_slice %240 {offsets = [0, 256], sizes = [8, 128], strides = [1, 1]} : vector<8x512xf32> to vector<8x128xf32>
    %258 = math.tanh %257 : vector<8x128xf32>
    %259 = vector.extract_strided_slice %240 {offsets = [0, 384], sizes = [8, 128], strides = [1, 1]} : vector<8x512xf32> to vector<8x128xf32>
    %cst_104 = arith.constant 5.000000e-01 : f32
    %260 = vector.broadcast %cst_104 : f32 to vector<8x128xf32>
    %261 = arith.mulf %260, %259 : vector<8x128xf32>
    %262 = math.tanh %261 : vector<8x128xf32>
    %cst_105 = arith.constant 5.000000e-01 : f32
    %263 = vector.broadcast %cst_105 : f32 to vector<8x128xf32>
    %264 = arith.mulf %263, %262 : vector<8x128xf32>
    %cst_106 = arith.constant 5.000000e-01 : f32
    %265 = vector.broadcast %cst_106 : f32 to vector<8x128xf32>
    %266 = arith.addf %264, %265 : vector<8x128xf32>
    %267 = arith.mulf %256, %233 : vector<8x128xf32>
    %268 = arith.mulf %248, %258 : vector<8x128xf32>
    %269 = arith.addf %267, %268 : vector<8x128xf32>
    %270 = math.tanh %269 : vector<8x128xf32>
    %271 = arith.mulf %266, %270 : vector<8x128xf32>
    %c48_107 = arith.constant 48 : index
    %c0_108 = arith.constant 0 : index
    %272 = vector.load %arg9[%c48_107, %c0_108] : memref<64x128xf32, #tpu.memory_space<vmem>>, vector<8x128xf32>
    tpu.vector_store %arg9[%c48_107, %c0_108], %271 {strides = array<i32>} : memref<64x128xf32, #tpu.memory_space<vmem>>, vector<8x128xf32>,
    %c56 = arith.constant 56 : index
    %c0_109 = arith.constant 0 : index
    %273 = vector.load %arg8[%c56, %c0_109] : memref<64x512xf32, #tpu.memory_space<vmem>>, vector<8x512xf32>
    %274 = arith.truncf %271 : vector<8x128xf32> to vector<8x128xbf16>
    %cst_110 = arith.constant dense<0.000000e+00> : vector<8x512xf32>
    %275 = tpu.matmul %274, %11, %cst_110 {dimension_numbers = #tpu.dot_dimension_numbers<[1], [0], [0], [1], [0, 0, 1, 1], [], []>} : vector<8x128xbf16>, vector<128x512xbf16>, vector<8x512xf32> -> vector<8x512xf32>
    %276 = arith.addf %273, %275 : vector<8x512xf32>
    %277 = vector.extract_strided_slice %276 {offsets = [0, 0], sizes = [8, 128], strides = [1, 1]} : vector<8x512xf32> to vector<8x128xf32>
    %cst_111 = arith.constant 5.000000e-01 : f32
    %278 = vector.broadcast %cst_111 : f32 to vector<8x128xf32>
    %279 = arith.mulf %278, %277 : vector<8x128xf32>
    %280 = math.tanh %279 : vector<8x128xf32>
    %cst_112 = arith.constant 5.000000e-01 : f32
    %281 = vector.broadcast %cst_112 : f32 to vector<8x128xf32>
    %282 = arith.mulf %281, %280 : vector<8x128xf32>
    %cst_113 = arith.constant 5.000000e-01 : f32
    %283 = vector.broadcast %cst_113 : f32 to vector<8x128xf32>
    %284 = arith.addf %282, %283 : vector<8x128xf32>
    %285 = vector.extract_strided_slice %276 {offsets = [0, 128], sizes = [8, 128], strides = [1, 1]} : vector<8x512xf32> to vector<8x128xf32>
    %cst_114 = arith.constant 5.000000e-01 : f32
    %286 = vector.broadcast %cst_114 : f32 to vector<8x128xf32>
    %287 = arith.mulf %286, %285 : vector<8x128xf32>
    %288 = math.tanh %287 : vector<8x128xf32>
    %cst_115 = arith.constant 5.000000e-01 : f32
    %289 = vector.broadcast %cst_115 : f32 to vector<8x128xf32>
    %290 = arith.mulf %289, %288 : vector<8x128xf32>
    %cst_116 = arith.constant 5.000000e-01 : f32
    %291 = vector.broadcast %cst_116 : f32 to vector<8x128xf32>
    %292 = arith.addf %290, %291 : vector<8x128xf32>
    %293 = vector.extract_strided_slice %276 {offsets = [0, 256], sizes = [8, 128], strides = [1, 1]} : vector<8x512xf32> to vector<8x128xf32>
    %294 = math.tanh %293 : vector<8x128xf32>
    %295 = vector.extract_strided_slice %276 {offsets = [0, 384], sizes = [8, 128], strides = [1, 1]} : vector<8x512xf32> to vector<8x128xf32>
    %cst_117 = arith.constant 5.000000e-01 : f32
    %296 = vector.broadcast %cst_117 : f32 to vector<8x128xf32>
    %297 = arith.mulf %296, %295 : vector<8x128xf32>
    %298 = math.tanh %297 : vector<8x128xf32>
    %cst_118 = arith.constant 5.000000e-01 : f32
    %299 = vector.broadcast %cst_118 : f32 to vector<8x128xf32>
    %300 = arith.mulf %299, %298 : vector<8x128xf32>
    %cst_119 = arith.constant 5.000000e-01 : f32
    %301 = vector.broadcast %cst_119 : f32 to vector<8x128xf32>
    %302 = arith.addf %300, %301 : vector<8x128xf32>
    %303 = arith.mulf %292, %269 : vector<8x128xf32>
    %304 = arith.mulf %284, %294 : vector<8x128xf32>
    %305 = arith.addf %303, %304 : vector<8x128xf32>
    %306 = math.tanh %305 : vector<8x128xf32>
    %307 = arith.mulf %302, %306 : vector<8x128xf32>
    %c56_120 = arith.constant 56 : index
    %c0_121 = arith.constant 0 : index
    %308 = vector.load %arg9[%c56_120, %c0_121] : memref<64x128xf32, #tpu.memory_space<vmem>>, vector<8x128xf32>
    tpu.vector_store %arg9[%c56_120, %c0_121], %307 {strides = array<i32>} : memref<64x128xf32, #tpu.memory_space<vmem>>, vector<8x128xf32>,
    %c0_122 = arith.constant 0 : index
    %c0_123 = arith.constant 0 : index
    %309 = vector.load %arg9[%c0_122, %c0_123] : memref<64x128xf32, #tpu.memory_space<vmem>>, vector<64x128xf32>
    %c0_124 = arith.constant 0 : index
    %c0_125 = arith.constant 0 : index
    %310 = vector.load %arg2[%c0_124, %c0_125] : memref<64x128xf32, #tpu.memory_space<vmem>>, vector<64x128xf32>
    %311 = arith.mulf %309, %310 : vector<64x128xf32>
    %312 = arith.truncf %311 : vector<64x128xf32> to vector<64x128xbf16>
    %c0_126 = arith.constant 0 : index
    %c0_127 = arith.constant 0 : index
    %313 = vector.load %arg6[%c0_126, %c0_127] : memref<128x256xbf16, #tpu.memory_space<vmem>>, vector<128x256xbf16>
    %cst_128 = arith.constant dense<0.000000e+00> : vector<64x256xf32>
    %314 = tpu.matmul %312, %313, %cst_128 {dimension_numbers = #tpu.dot_dimension_numbers<[1], [0], [0], [1], [0, 0, 1, 1], [], []>} : vector<64x128xbf16>, vector<128x256xbf16>, vector<64x256xf32> -> vector<64x256xf32>
    %c0_129 = arith.constant 0 : index
    %c512 = arith.constant 512 : index
    %315 = vector.load %arg5[%c0_129, %c512] : memref<1x768xf32, #tpu.memory_space<vmem>>, vector<1x256xf32>
    %316 = vector.broadcast %315 : vector<1x256xf32> to vector<64x256xf32>
    %317 = arith.addf %314, %316 : vector<64x256xf32>
    %c0_130 = arith.constant 0 : index
    %c0_131 = arith.constant 0 : index
    %318 = vector.load %arg7[%c0_130, %c0_131] : memref<64x256xf32, #tpu.memory_space<vmem>>, vector<64x256xf32>
    tpu.vector_store %arg7[%c0_130, %c0_131], %317 {strides = array<i32>} : memref<64x256xf32, #tpu.memory_space<vmem>>, vector<64x256xf32>,
    return
  }
}

</mosaic_0001>

<llo_original>
// kernel: word_lstm_forward.1
$region0: #{word_lstm_forward.1}
  #allocation0 [shape = 'u32[]', space=smem, size = 0x4, offset = 0x4, fixed_abs, tag = 'smem constant byte address 0x4 - core index']
  #allocation1 [shape = 'u32[144,128]{1,0:T(1,128)}', space=vmem, size = 0x12000, scoped, tag = 'internal scratch']
  #allocation2 [shape = 'f32[64,512]{1,0:T(8,128)}', space=vmem, size = 0x20000, scoped, tag = 'scratch operand']
  #allocation3 [shape = 'f32[64,128]{1,0:T(8,128)}', space=vmem, size = 0x8000, scoped, tag = 'scratch operand']
  %s0 = inlined_call_operand.vmem [shape: f32[8,128], index: 0, kind: input, shape index: {}]
  %s1 = inlined_call_operand.vmem [shape: s32[56,1], index: 1, kind: input, shape index: {}]
  %s2 = inlined_call_operand.vmem [shape: f32[64,128], index: 2, kind: input, shape index: {}]
  %s3 = inlined_call_operand.vmem [shape: bf16[256,512], index: 3, kind: input, shape index: {}]
  %s4 = inlined_call_operand.vmem [shape: bf16[256,512], index: 4, kind: input, shape index: {}]
  %s5 = inlined_call_operand.vmem [shape: f32[1,768], index: 5, kind: input, shape index: {}]
  %s6 = inlined_call_operand.vmem [shape: bf16[128,256], index: 6, kind: input, shape index: {}]
  %s7 = inlined_call_operand.vmem [shape: f32[64,256], index: 7, kind: output, shape index: {}]
  %s8 = sld [smem:[#allocation0]]
  $region38: #{word_lstm_forward.1} parent=0
    _
  %s10 = ssub.s32 1, %s8
  %s11 = scalar_select 0, %s10, %s8
  // Predicated region
  $region2: #{word_lstm_forward.1} parent=0 // pred_check
    _
  $region3: #{word_lstm_forward.1} parent=0 // pred_check_branch
    %13 = sbr.rel (0) target = $region5
  $region4: #{word_lstm_forward.1} parent=0 // pred_region
    _
  $region5: #{word_lstm_forward.1} parent=0 // pred_fallthru
    _
  // Predicated region
  $region6: #{word_lstm_forward.1} parent=0 // pred_check
    _
  $region7: #{word_lstm_forward.1} parent=0 // pred_check_branch
    %15 = sbr.rel (0) target = $region9
  $region8: #{word_lstm_forward.1} parent=0 // pred_region
    _
  $region9: #{word_lstm_forward.1} parent=0 // pred_fallthru
    _
  // Predicated region
  $region10: #{word_lstm_forward.1} parent=0 // pred_check
    _
  $region11: #{word_lstm_forward.1} parent=0 // pred_check_branch
    %17 = sbr.rel (0) target = $region13
  $region12: #{word_lstm_forward.1} parent=0 // pred_region
    _
  $region13: #{word_lstm_forward.1} parent=0 // pred_fallthru
    _
  // Predicated region
  $region14: #{word_lstm_forward.1} parent=0 // pred_check
    _
  $region15: #{word_lstm_forward.1} parent=0 // pred_check_branch
    %19 = sbr.rel (0) target = $region17
  $region16: #{word_lstm_forward.1} parent=0 // pred_region
    _
  $region17: #{word_lstm_forward.1} parent=0 // pred_fallthru
    _
  // Predicated region
  $region18: #{word_lstm_forward.1} parent=0 // pred_check
    _
  $region19: #{word_lstm_forward.1} parent=0 // pred_check_branch
    %21 = sbr.rel (0) target = $region21
  $region20: #{word_lstm_forward.1} parent=0 // pred_region
    _
  $region21: #{word_lstm_forward.1} parent=0 // pred_fallthru
    _
  // Predicated region
  $region22: #{word_lstm_forward.1} parent=0 // pred_check
    _
  $region23: #{word_lstm_forward.1} parent=0 // pred_check_branch
    %23 = sbr.rel (0) target = $region25
  $region24: #{word_lstm_forward.1} parent=0 // pred_region
    _
  $region25: #{word_lstm_forward.1} parent=0 // pred_fallthru
    _
  // Predicated region
  $region26: #{word_lstm_forward.1} parent=0 // pred_check
    _
  $region27: #{word_lstm_forward.1} parent=0 // pred_check_branch
    %25 = sbr.rel (0) target = $region29
  $region28: #{word_lstm_forward.1} parent=0 // pred_region
    _
  $region29: #{word_lstm_forward.1} parent=0 // pred_fallthru
    _
  %v27 = vld [vmem:[%s1] sm:$0xff]
  %v28 = vld [vmem:[%s1 + $0x8] sm:$0xff]
  %v29 = vld [vmem:[%s1 + $0x10] sm:$0xff]
  %v30 = vld [vmem:[%s1 + $0x18] sm:$0xff]
  %v31 = vld [vmem:[%s1 + $0x20] sm:$0xff]
  %v32 = vld [vmem:[%s1 + $0x28] sm:$0xff]
  %v33 = vld [vmem:[%s1 + $0x30] sm:$0xff]
  %v34 = vlaneseq
  %v35 = vand.u32 %v34, 127
  %v36 = vadd.s32 %v35, 128
  %37 = vset.pattern.permute.xlu0 0
  %38 = vperm.xlu0 %37, %v27
  %v39 = vpop.permute.xlu0 %38
  %40 = vset.pattern.permute.xlu0 0
  %41 = vperm.xlu0 %40, %v28
  %v42 = vpop.permute.xlu0 %41
  %43 = vset.pattern.permute.xlu0 0
  %44 = vperm.xlu0 %43, %v29
  %v45 = vpop.permute.xlu0 %44
  %46 = vset.pattern.permute.xlu0 0
  %47 = vperm.xlu0 %46, %v30
  %v48 = vpop.permute.xlu0 %47
  %49 = vset.pattern.permute.xlu0 0
  %50 = vperm.xlu0 %49, %v31
  %v51 = vpop.permute.xlu0 %50
  %52 = vset.pattern.permute.xlu0 0
  %53 = vperm.xlu0 %52, %v32
  %v54 = vpop.permute.xlu0 %53
  %55 = vset.pattern.permute.xlu0 0
  %56 = vperm.xlu0 %55, %v33
  %v57 = vpop.permute.xlu0 %56
  %vm58 = vcmp.eq.s32.totalorder %v35, %v39
  %vm59 = vcmp.eq.s32.totalorder %v36, %v39
  %vm60 = vcmp.eq.s32.totalorder %v35, %v42
  %vm61 = vcmp.eq.s32.totalorder %v36, %v42
  %vm62 = vcmp.eq.s32.totalorder %v35, %v45
  %vm63 = vcmp.eq.s32.totalorder %v36, %v45
  %vm64 = vcmp.eq.s32.totalorder %v35, %v48
  %vm65 = vcmp.eq.s32.totalorder %v36, %v48
  %vm66 = vcmp.eq.s32.totalorder %v35, %v51
  %vm67 = vcmp.eq.s32.totalorder %v36, %v51
  %vm68 = vcmp.eq.s32.totalorder %v35, %v54
  %vm69 = vcmp.eq.s32.totalorder %v36, %v54
  %vm70 = vcmp.eq.s32.totalorder %v35, %v57
  %vm71 = vcmp.eq.s32.totalorder %v36, %v57
  %v72 = vsel %vm58, 1, 0
  %v73 = vsel %vm59, 1, 0
  %v74 = vsel %vm60, 1, 0
  %v75 = vsel %vm61, 1, 0
  %v76 = vsel %vm62, 1, 0
  %v77 = vsel %vm63, 1, 0
  %v78 = vsel %vm64, 1, 0
  %v79 = vsel %vm65, 1, 0
  %v80 = vsel %vm66, 1, 0
  %v81 = vsel %vm67, 1, 0
  %v82 = vsel %vm68, 1, 0
  %v83 = vsel %vm69, 1, 0
  %v84 = vsel %vm70, 1, 0
  %v85 = vsel %vm71, 1, 0
  %v86 = vcvt.s32.f32 %v72
  %v87 = vcvt.s32.f32 %v73
  %v88 = vcvt.s32.f32 %v74
  %v89 = vcvt.s32.f32 %v75
  %v90 = vcvt.s32.f32 %v76
  %v91 = vcvt.s32.f32 %v77
  %v92 = vcvt.s32.f32 %v78
  %v93 = vcvt.s32.f32 %v79
  %v94 = vcvt.s32.f32 %v80
  %v95 = vcvt.s32.f32 %v81
  %v96 = vcvt.s32.f32 %v82
  %v97 = vcvt.s32.f32 %v83
  %v98 = vcvt.s32.f32 %v84
  %v99 = vcvt.s32.f32 %v85
  %v100 = vpack.c.bf16 %v88, %v86
  %v101 = vpack.c.bf16 %v89, %v87
  %v102 = vpack.c.bf16 %v92, %v90
  %v103 = vpack.c.bf16 %v93, %v91
  %v104 = vpack.c.bf16 %v96, %v94
  %v105 = vpack.c.bf16 %v97, %v95
  %v106 = vpack.c.bf16 %v98, %v98
  %v107 = vpack.c.bf16 %v99, %v99
  %v108 = vld [vmem:[%s3] sm:$0xff]
  %v109 = vld [vmem:[%s3 + $0x8] sm:$0xff]
  %v110 = vld [vmem:[%s3 + $0x10] sm:$0xff]
  %v111 = vld [vmem:[%s3 + $0x18] sm:$0xff]
  %v112 = vld [vmem:[%s3 + $0x20] sm:$0xff]
  %v113 = vld [vmem:[%s3 + $0x28] sm:$0xff]
  %v114 = vld [vmem:[%s3 + $0x30] sm:$0xff]
  %v115 = vld [vmem:[%s3 + $0x38] sm:$0xff]
  %v116 = vld [vmem:[%s3 + $0x40] sm:$0xff]
  %v117 = vld [vmem:[%s3 + $0x48] sm:$0xff]
  %v118 = vld [vmem:[%s3 + $0x50] sm:$0xff]
  %v119 = vld [vmem:[%s3 + $0x58] sm:$0xff]
  %v120 = vld [vmem:[%s3 + $0x60] sm:$0xff]
  %v121 = vld [vmem:[%s3 + $0x68] sm:$0xff]
  %v122 = vld [vmem:[%s3 + $0x70] sm:$0xff]
  %v123 = vld [vmem:[%s3 + $0x78] sm:$0xff]
  %v124 = vld [vmem:[%s3 + $0x80] sm:$0xff]
  %v125 = vld [vmem:[%s3 + $0x88] sm:$0xff]
  %v126 = vld [vmem:[%s3 + $0x90] sm:$0xff]
  %v127 = vld [vmem:[%s3 + $0x98] sm:$0xff]
  %v128 = vld [vmem:[%s3 + $0xa0] sm:$0xff]
  %v129 = vld [vmem:[%s3 + $0xa8] sm:$0xff]
  %v130 = vld [vmem:[%s3 + $0xb0] sm:$0xff]
  %v131 = vld [vmem:[%s3 + $0xb8] sm:$0xff]
  %v132 = vld [vmem:[%s3 + $0xc0] sm:$0xff]
  %v133 = vld [vmem:[%s3 + $0xc8] sm:$0xff]
  %v134 = vld [vmem:[%s3 + $0xd0] sm:$0xff]
  %v135 = vld [vmem:[%s3 + $0xd8] sm:$0xff]
  %v136 = vld [vmem:[%s3 + $0xe0] sm:$0xff]
  %v137 = vld [vmem:[%s3 + $0xe8] sm:$0xff]
  %v138 = vld [vmem:[%s3 + $0xf0] sm:$0xff]
  %v139 = vld [vmem:[%s3 + $0xf8] sm:$0xff]
  %v140 = vld [vmem:[%s3 + $0x100] sm:$0xff]
  %v141 = vld [vmem:[%s3 + $0x108] sm:$0xff]
  %v142 = vld [vmem:[%s3 + $0x110] sm:$0xff]
  %v143 = vld [vmem:[%s3 + $0x118] sm:$0xff]
  %v144 = vld [vmem:[%s3 + $0x120] sm:$0xff]
  %v145 = vld [vmem:[%s3 + $0x128] sm:$0xff]
  %v146 = vld [vmem:[%s3 + $0x130] sm:$0xff]
  %v147 = vld [vmem:[%s3 + $0x138] sm:$0xff]
  %v148 = vld [vmem:[%s3 + $0x140] sm:$0xff]
  %v149 = vld [vmem:[%s3 + $0x148] sm:$0xff]
  %v150 = vld [vmem:[%s3 + $0x150] sm:$0xff]
  %v151 = vld [vmem:[%s3 + $0x158] sm:$0xff]
  %v152 = vld [vmem:[%s3 + $0x160] sm:$0xff]
  %v153 = vld [vmem:[%s3 + $0x168] sm:$0xff]
  %v154 = vld [vmem:[%s3 + $0x170] sm:$0xff]
  %v155 = vld [vmem:[%s3 + $0x178] sm:$0xff]
  %v156 = vld [vmem:[%s3 + $0x180] sm:$0xff]
  %v157 = vld [vmem:[%s3 + $0x188] sm:$0xff]
  %v158 = vld [vmem:[%s3 + $0x190] sm:$0xff]
  %v159 = vld [vmem:[%s3 + $0x198] sm:$0xff]
  %v160 = vld [vmem:[%s3 + $0x1a0] sm:$0xff]
  %v161 = vld [vmem:[%s3 + $0x1a8] sm:$0xff]
  %v162 = vld [vmem:[%s3 + $0x1b0] sm:$0xff]
  %v163 = vld [vmem:[%s3 + $0x1b8] sm:$0xff]
  %v164 = vld [vmem:[%s3 + $0x1c0] sm:$0xff]
  %v165 = vld [vmem:[%s3 + $0x1c8] sm:$0xff]
  %v166 = vld [vmem:[%s3 + $0x1d0] sm:$0xff]
  %v167 = vld [vmem:[%s3 + $0x1d8] sm:$0xff]
  %v168 = vld [vmem:[%s3 + $0x1e0] sm:$0xff]
  %v169 = vld [vmem:[%s3 + $0x1e8] sm:$0xff]
  %v170 = vld [vmem:[%s3 + $0x1f0] sm:$0xff]
  %v171 = vld [vmem:[%s3 + $0x1f8] sm:$0xff]
  %v236 = vunpack.c.l.b16 %v108
  %v237 = vunpack.c.h.b16 %v108
  %v238 = vunpack.c.l.b16 %v109
  %v239 = vunpack.c.h.b16 %v109
  %v240 = vunpack.c.l.b16 %v110
  %v241 = vunpack.c.h.b16 %v110
  %v242 = vunpack.c.l.b16 %v111
  %v243 = vunpack.c.h.b16 %v111
  %v244 = vunpack.c.l.b16 %v112
  %v245 = vunpack.c.h.b16 %v112
  %v246 = vunpack.c.l.b16 %v113
  %v247 = vunpack.c.h.b16 %v113
  %v248 = vunpack.c.l.b16 %v114
  %v249 = vunpack.c.h.b16 %v114
  %v250 = vunpack.c.l.b16 %v115
  %v251 = vunpack.c.h.b16 %v115
  %v252 = vunpack.c.l.b16 %v116
  %v253 = vunpack.c.h.b16 %v116
  %v254 = vunpack.c.l.b16 %v117
  %v255 = vunpack.c.h.b16 %v117
  %v256 = vunpack.c.l.b16 %v118
  %v257 = vunpack.c.h.b16 %v118
  %v258 = vunpack.c.l.b16 %v119
  %v259 = vunpack.c.h.b16 %v119
  %v260 = vunpack.c.l.b16 %v120
  %v261 = vunpack.c.h.b16 %v120
  %v262 = vunpack.c.l.b16 %v121
  %v263 = vunpack.c.h.b16 %v121
  %v264 = vunpack.c.l.b16 %v122
  %v265 = vunpack.c.h.b16 %v122
  %v266 = vunpack.c.l.b16 %v123
  %v267 = vunpack.c.h.b16 %v123
  %v268 = vunpack.c.l.b16 %v124
  %v269 = vunpack.c.h.b16 %v124
  %v270 = vunpack.c.l.b16 %v125
  %v271 = vunpack.c.h.b16 %v125
  %v272 = vunpack.c.l.b16 %v126
  %v273 = vunpack.c.h.b16 %v126
  %v274 = vunpack.c.l.b16 %v127
  %v275 = vunpack.c.h.b16 %v127
  %v276 = vunpack.c.l.b16 %v128
  %v277 = vunpack.c.h.b16 %v128
  %v278 = vunpack.c.l.b16 %v129
  %v279 = vunpack.c.h.b16 %v129
  %v280 = vunpack.c.l.b16 %v130
  %v281 = vunpack.c.h.b16 %v130
  %v282 = vunpack.c.l.b16 %v131
  %v283 = vunpack.c.h.b16 %v131
  %v284 = vunpack.c.l.b16 %v132
  %v285 = vunpack.c.h.b16 %v132
  %v286 = vunpack.c.l.b16 %v133
  %v287 = vunpack.c.h.b16 %v133
  %v288 = vunpack.c.l.b16 %v134
  %v289 = vunpack.c.h.b16 %v134
  %v290 = vunpack.c.l.b16 %v135
  %v291 = vunpack.c.h.b16 %v135
  %v292 = vunpack.c.l.b16 %v136
  %v293 = vunpack.c.h.b16 %v136
  %v294 = vunpack.c.l.b16 %v137
  %v295 = vunpack.c.h.b16 %v137
  %v296 = vunpack.c.l.b16 %v138
  %v297 = vunpack.c.h.b16 %v138
  %v298 = vunpack.c.l.b16 %v139
  %v299 = vunpack.c.h.b16 %v139
  %v300 = vunpack.c.l.b16 %v140
  %v301 = vunpack.c.h.b16 %v140
  %v302 = vunpack.c.l.b16 %v141
  %v303 = vunpack.c.h.b16 %v141
  %v304 = vunpack.c.l.b16 %v142
  %v305 = vunpack.c.h.b16 %v142
  %v306 = vunpack.c.l.b16 %v143
  %v307 = vunpack.c.h.b16 %v143
  %v308 = vunpack.c.l.b16 %v144
  %v309 = vunpack.c.h.b16 %v144
  %v310 = vunpack.c.l.b16 %v145
  %v311 = vunpack.c.h.b16 %v145
  %v312 = vunpack.c.l.b16 %v146
  %v313 = vunpack.c.h.b16 %v146
  %v314 = vunpack.c.l.b16 %v147
  %v315 = vunpack.c.h.b16 %v147
  %v316 = vunpack.c.l.b16 %v148
  %v317 = vunpack.c.h.b16 %v148
  %v318 = vunpack.c.l.b16 %v149
  %v319 = vunpack.c.h.b16 %v149
  %v320 = vunpack.c.l.b16 %v150
  %v321 = vunpack.c.h.b16 %v150
  %v322 = vunpack.c.l.b16 %v151
  %v323 = vunpack.c.h.b16 %v151
  %v324 = vunpack.c.l.b16 %v152
  %v325 = vunpack.c.h.b16 %v152
  %v326 = vunpack.c.l.b16 %v153
  %v327 = vunpack.c.h.b16 %v153
  %v328 = vunpack.c.l.b16 %v154
  %v329 = vunpack.c.h.b16 %v154
  %v330 = vunpack.c.l.b16 %v155
  %v331 = vunpack.c.h.b16 %v155
  %v332 = vunpack.c.l.b16 %v156
  %v333 = vunpack.c.h.b16 %v156
  %v334 = vunpack.c.l.b16 %v157
  %v335 = vunpack.c.h.b16 %v157
  %v336 = vunpack.c.l.b16 %v158
  %v337 = vunpack.c.h.b16 %v158
  %v338 = vunpack.c.l.b16 %v159
  %v339 = vunpack.c.h.b16 %v159
  %v340 = vunpack.c.l.b16 %v160
  %v341 = vunpack.c.h.b16 %v160
  %v342 = vunpack.c.l.b16 %v161
  %v343 = vunpack.c.h.b16 %v161
  %v344 = vunpack.c.l.b16 %v162
  %v345 = vunpack.c.h.b16 %v162
  %v346 = vunpack.c.l.b16 %v163
  %v347 = vunpack.c.h.b16 %v163
  %v348 = vunpack.c.l.b16 %v164
  %v349 = vunpack.c.h.b16 %v164
  %v350 = vunpack.c.l.b16 %v165
  %v351 = vunpack.c.h.b16 %v165
  %v352 = vunpack.c.l.b16 %v166
  %v353 = vunpack.c.h.b16 %v166
  %v354 = vunpack.c.l.b16 %v167
  %v355 = vunpack.c.h.b16 %v167
  %v356 = vunpack.c.l.b16 %v168
  %v357 = vunpack.c.h.b16 %v168
  %v358 = vunpack.c.l.b16 %v169
  %v359 = vunpack.c.h.b16 %v169
  %v360 = vunpack.c.l.b16 %v170
  %v361 = vunpack.c.h.b16 %v170
  %v362 = vunpack.c.l.b16 %v171
  %v363 = vunpack.c.h.b16 %v171
  %v364 = vpack.c.b16 %v240, %v236
  %v365 = vpack.c.b16 %v241, %v237
  %v366 = vpack.c.b16 %v242, %v238
  %v367 = vpack.c.b16 %v243, %v239
  %v368 = vpack.c.b16 %v248, %v244
  %v369 = vpack.c.b16 %v249, %v245
  %v370 = vpack.c.b16 %v250, %v246
  %v371 = vpack.c.b16 %v251, %v247
  %v372 = vpack.c.b16 %v256, %v252
  %v373 = vpack.c.b16 %v257, %v253
  %v374 = vpack.c.b16 %v258, %v254
  %v375 = vpack.c.b16 %v259, %v255
  %v376 = vpack.c.b16 %v264, %v260
  %v377 = vpack.c.b16 %v265, %v261
  %v378 = vpack.c.b16 %v266, %v262
  %v379 = vpack.c.b16 %v267, %v263
  %v380 = vpack.c.b16 %v272, %v268
  %v381 = vpack.c.b16 %v273, %v269
  %v382 = vpack.c.b16 %v274, %v270
  %v383 = vpack.c.b16 %v275, %v271
  %v384 = vpack.c.b16 %v280, %v276
  %v385 = vpack.c.b16 %v281, %v277
  %v386 = vpack.c.b16 %v282, %v278
  %v387 = vpack.c.b16 %v283, %v279
  %v388 = vpack.c.b16 %v288, %v284
  %v389 = vpack.c.b16 %v289, %v285
  %v390 = vpack.c.b16 %v290, %v286
  %v391 = vpack.c.b16 %v291, %v287
  %v392 = vpack.c.b16 %v296, %v292
  %v393 = vpack.c.b16 %v297, %v293
  %v394 = vpack.c.b16 %v298, %v294
  %v395 = vpack.c.b16 %v299, %v295
  %v396 = vpack.c.b16 %v304, %v300
  %v397 = vpack.c.b16 %v305, %v301
  %v398 = vpack.c.b16 %v306, %v302
  %v399 = vpack.c.b16 %v307, %v303
  %v400 = vpack.c.b16 %v312, %v308
  %v401 = vpack.c.b16 %v313, %v309
  %v402 = vpack.c.b16 %v314, %v310
  %v403 = vpack.c.b16 %v315, %v311
  %v404 = vpack.c.b16 %v320, %v316
  %v405 = vpack.c.b16 %v321, %v317
  %v406 = vpack.c.b16 %v322, %v318
  %v407 = vpack.c.b16 %v323, %v319
  %v408 = vpack.c.b16 %v328, %v324
  %v409 = vpack.c.b16 %v329, %v325
  %v410 = vpack.c.b16 %v330, %v326
  %v411 = vpack.c.b16 %v331, %v327
  %v412 = vpack.c.b16 %v336, %v332
  %v413 = vpack.c.b16 %v337, %v333
  %v414 = vpack.c.b16 %v338, %v334
  %v415 = vpack.c.b16 %v339, %v335
  %v416 = vpack.c.b16 %v344, %v340
  %v417 = vpack.c.b16 %v345, %v341
  %v418 = vpack.c.b16 %v346, %v342
  %v419 = vpack.c.b16 %v347, %v343
  %v420 = vpack.c.b16 %v352, %v348
  %v421 = vpack.c.b16 %v353, %v349
  %v422 = vpack.c.b16 %v354, %v350
  %v423 = vpack.c.b16 %v355, %v351
  %v424 = vpack.c.b16 %v360, %v356
  %v425 = vpack.c.b16 %v361, %v357
  %v426 = vpack.c.b16 %v362, %v358
  %v427 = vpack.c.b16 %v363, %v359
  %492 = vmatprep.subr.bf16.mxu0 %v365
  %493 = vmatpush1.bf16.msra.mxu0 %v364
  %494 = vmatprep.subr.bf16.mxu0 %v369
  %495 = vmatpush1.bf16.msra.mxu0 %v368
  %496 = vmatprep.subr.bf16.mxu0 %v373
  %497 = vmatpush1.bf16.msra.mxu0 %v372
  %498 = vmatprep.subr.bf16.mxu0 %v377
  %499 = vmatpush1.bf16.msra.mxu0 %v376
  %500 = vmatprep.subr.bf16.mxu0 %v381
  %501 = vmatpush1.bf16.msra.mxu0 %v380
  %502 = vmatprep.subr.bf16.mxu0 %v385
  %503 = vmatpush1.bf16.msra.mxu0 %v384
  %504 = vmatprep.subr.bf16.mxu0 %v389
  %505 = vmatpush1.bf16.msra.mxu0 %v388
  %506 = vmatprep.subr.bf16.mxu0 %v393
  %507 = vmatpush1.bf16.msra.mxu0 %v392
  %508 = vmatprep.subr.bf16.mxu0 %v397
  %509 = vmatpush1.bf16.msra.mxu0 %v396
  %510 = vmatprep.subr.bf16.mxu0 %v401
  %511 = vmatpush1.bf16.msra.mxu0 %v400
  %512 = vmatprep.subr.bf16.mxu0 %v405
  %513 = vmatpush1.bf16.msra.mxu0 %v404
  %514 = vmatprep.subr.bf16.mxu0 %v409
  %515 = vmatpush1.bf16.msra.mxu0 %v408
  %516 = vmatprep.subr.bf16.mxu0 %v413
  %517 = vmatpush1.bf16.msra.mxu0 %v412
  %518 = vmatprep.subr.bf16.mxu0 %v417
  %519 = vmatpush1.bf16.msra.mxu0 %v416
  %520 = vmatprep.subr.bf16.mxu0 %v421
  %521 = vmatpush1.bf16.msra.mxu0 %v420
  %522 = vmatprep.subr.bf16.mxu0 %v425
  %523 = vmatpush1.bf16.msra.mxu0 %v424
  %524 = vmatprep.mubr.bf16.mxu0 %v101
  %525 = vmatmul.mubr.bf16.gmra.mrb[0].mxu0 %v100
  %v526 = vpop.f32.mrb[0].mxu0
  %v527 = vadd.f32 0.0, %v526
  %v528 = vpop.f32.mrb[0].mxu0
  %v529 = vadd.f32 0.0, %v528
  %v530 = vpop.f32.mrb[0].mxu0
  %v531 = vadd.f32 0.0, %v530
  %v532 = vpop.f32.mrb[0].mxu0
  %v533 = vadd.f32 0.0, %v532
  %534 = vmatprep.mubr.bf16.mxu0 %v103
  %535 = vmatmul.mubr.bf16.gmra.mrb[0].mxu0 %v102
  %v536 = vpop.f32.mrb[0].mxu0
  %v537 = vadd.f32 0.0, %v536
  %v538 = vpop.f32.mrb[0].mxu0
  %v539 = vadd.f32 0.0, %v538
  %v540 = vpop.f32.mrb[0].mxu0
  %v541 = vadd.f32 0.0, %v540
  %v542 = vpop.f32.mrb[0].mxu0
  %v543 = vadd.f32 0.0, %v542
  %544 = vmatprep.mubr.bf16.mxu0 %v105
  %545 = vmatmul.mubr.bf16.gmra.mrb[0].mxu0 %v104
  %v546 = vpop.f32.mrb[0].mxu0
  %v547 = vadd.f32 0.0, %v546
  %v548 = vpop.f32.mrb[0].mxu0
  %v549 = vadd.f32 0.0, %v548
  %v550 = vpop.f32.mrb[0].mxu0
  %v551 = vadd.f32 0.0, %v550
  %v552 = vpop.f32.mrb[0].mxu0
  %v553 = vadd.f32 0.0, %v552
  %554 = vmatprep.mubr.bf16.mxu0 %v107
  %555 = vmatmul.mubr.bf16.gmra.mrb[0].mxu0 %v106
  %v556 = vpop.f32.mrb[0].mxu0
  %v557 = vadd.f32 0.0, %v556
  %v558 = vpop.f32.mrb[0].mxu0
  %v559 = vadd.f32 0.0, %v558
  %v560 = vpop.f32.mrb[0].mxu0
  %v561 = vpop.f32.mrb[0].mxu0
  %562 = vdwg.mxu0
  %563 = vmatprep.subr.bf16.mxu0 %v367
  %564 = vmatpush1.bf16.msra.mxu0 %v366
  %565 = vmatprep.subr.bf16.mxu0 %v371
  %566 = vmatpush1.bf16.msra.mxu0 %v370
  %567 = vmatprep.subr.bf16.mxu0 %v375
  %568 = vmatpush1.bf16.msra.mxu0 %v374
  %569 = vmatprep.subr.bf16.mxu0 %v379
  %570 = vmatpush1.bf16.msra.mxu0 %v378
  %571 = vmatprep.subr.bf16.mxu0 %v383
  %572 = vmatpush1.bf16.msra.mxu0 %v382
  %573 = vmatprep.subr.bf16.mxu0 %v387
  %574 = vmatpush1.bf16.msra.mxu0 %v386
  %575 = vmatprep.subr.bf16.mxu0 %v391
  %576 = vmatpush1.bf16.msra.mxu0 %v390
  %577 = vmatprep.subr.bf16.mxu0 %v395
  %578 = vmatpush1.bf16.msra.mxu0 %v394
  %579 = vmatprep.subr.bf16.mxu0 %v399
  %580 = vmatpush1.bf16.msra.mxu0 %v398
  %581 = vmatprep.subr.bf16.mxu0 %v403
  %582 = vmatpush1.bf16.msra.mxu0 %v402
  %583 = vmatprep.subr.bf16.mxu0 %v407
  %584 = vmatpush1.bf16.msra.mxu0 %v406
  %585 = vmatprep.subr.bf16.mxu0 %v411
  %586 = vmatpush1.bf16.msra.mxu0 %v410
  %587 = vmatprep.subr.bf16.mxu0 %v415
  %588 = vmatpush1.bf16.msra.mxu0 %v414
  %589 = vmatprep.subr.bf16.mxu0 %v419
  %590 = vmatpush1.bf16.msra.mxu0 %v418
  %591 = vmatprep.subr.bf16.mxu0 %v423
  %592 = vmatpush1.bf16.msra.mxu0 %v422
  %593 = vmatprep.subr.bf16.mxu0 %v427
  %594 = vmatpush1.bf16.msra.mxu0 %v426
  %595 = vmatprep.mubr.bf16.mxu0 %v101
  %596 = vmatmul.mubr.bf16.gmra.mrb[0].mxu0 %v100
  %v597 = vpop.f32.mrb[0].mxu0
  %v598 = vadd.f32 0.0, %v597
  %v599 = vpop.f32.mrb[0].mxu0
  %v600 = vadd.f32 0.0, %v599
  %v601 = vpop.f32.mrb[0].mxu0
  %v602 = vadd.f32 0.0, %v601
  %v603 = vpop.f32.mrb[0].mxu0
  %v604 = vadd.f32 0.0, %v603
  %605 = vmatprep.mubr.bf16.mxu0 %v103
  %606 = vmatmul.mubr.bf16.gmra.mrb[0].mxu0 %v102
  %v607 = vpop.f32.mrb[0].mxu0
  %v608 = vadd.f32 0.0, %v607
  %v609 = vpop.f32.mrb[0].mxu0
  %v610 = vadd.f32 0.0, %v609
  %v611 = vpop.f32.mrb[0].mxu0
  %v612 = vadd.f32 0.0, %v611
  %v613 = vpop.f32.mrb[0].mxu0
  %v614 = vadd.f32 0.0, %v613
  %615 = vmatprep.mubr.bf16.mxu0 %v105
  %616 = vmatmul.mubr.bf16.gmra.mrb[0].mxu0 %v104
  %v617 = vpop.f32.mrb[0].mxu0
  %v618 = vadd.f32 0.0, %v617
  %v619 = vpop.f32.mrb[0].mxu0
  %v620 = vadd.f32 0.0, %v619
  %v621 = vpop.f32.mrb[0].mxu0
  %v622 = vadd.f32 0.0, %v621
  %v623 = vpop.f32.mrb[0].mxu0
  %v624 = vadd.f32 0.0, %v623
  %625 = vmatprep.mubr.bf16.mxu0 %v107
  %626 = vmatmul.mubr.bf16.gmra.mrb[0].mxu0 %v106
  %v627 = vpop.f32.mrb[0].mxu0
  %v628 = vadd.f32 0.0, %v627
  %v629 = vpop.f32.mrb[0].mxu0
  %v630 = vadd.f32 0.0, %v629
  %v631 = vpop.f32.mrb[0].mxu0
  %v632 = vpop.f32.mrb[0].mxu0
  %633 = vdwg.mxu0
  %634 = vst [vmem:[#allocation2 + $0x20] sm:$0xff] %v527
  %635 = vst [vmem:[#allocation2 + $0x28] sm:$0xff] %v529
  %636 = vst [vmem:[#allocation2 + $0x30] sm:$0xff] %v598
  %637 = vst [vmem:[#allocation2 + $0x38] sm:$0xff] %v600
  %638 = vst [vmem:[#allocation2 + $0x40] sm:$0xff] %v531
  %639 = vst [vmem:[#allocation2 + $0x48] sm:$0xff] %v533
  %640 = vst [vmem:[#allocation2 + $0x50] sm:$0xff] %v602
  %641 = vst [vmem:[#allocation2 + $0x58] sm:$0xff] %v604
  %642 = vst [vmem:[#allocation2 + $0x60] sm:$0xff] %v537
  %643 = vst [vmem:[#allocation2 + $0x68] sm:$0xff] %v539
  %644 = vst [vmem:[#allocation2 + $0x70] sm:$0xff] %v608
  %645 = vst [vmem:[#allocation2 + $0x78] sm:$0xff] %v610
  %646 = vst [vmem:[#allocation2 + $0x80] sm:$0xff] %v541
  %647 = vst [vmem:[#allocation2 + $0x88] sm:$0xff] %v543
  %648 = vst [vmem:[#allocation2 + $0x90] sm:$0xff] %v612
  %649 = vst [vmem:[#allocation2 + $0x98] sm:$0xff] %v614
  %650 = vst [vmem:[#allocation2 + $0xa0] sm:$0xff] %v547
  %651 = vst [vmem:[#allocation2 + $0xa8] sm:$0xff] %v549
  %652 = vst [vmem:[#allocation2 + $0xb0] sm:$0xff] %v618
  %653 = vst [vmem:[#allocation2 + $0xb8] sm:$0xff] %v620
  %654 = vst [vmem:[#allocation2 + $0xc0] sm:$0xff] %v551
  %655 = vst [vmem:[#allocation2 + $0xc8] sm:$0xff] %v553
  %656 = vst [vmem:[#allocation2 + $0xd0] sm:$0xff] %v622
  %657 = vst [vmem:[#allocation2 + $0xd8] sm:$0xff] %v624
  %658 = vst [vmem:[#allocation2 + $0xe0] sm:$0xff] %v557
  %659 = vst [vmem:[#allocation2 + $0xe8] sm:$0xff] %v559
  %660 = vst [vmem:[#allocation2 + $0xf0] sm:$0xff] %v628
  %661 = vst [vmem:[#allocation2 + $0xf8] sm:$0xff] %v630
  %v662 = vld [vmem:[%s4] sm:$0xff]
  %v663 = vld [vmem:[%s4 + $0x8] sm:$0xff]
  %v664 = vld [vmem:[%s4 + $0x10] sm:$0xff]
  %v665 = vld [vmem:[%s4 + $0x18] sm:$0xff]
  %v666 = vld [vmem:[%s4 + $0x20] sm:$0xff]
  %v667 = vld [vmem:[%s4 + $0x28] sm:$0xff]
  %v668 = vld [vmem:[%s4 + $0x30] sm:$0xff]
  %v669 = vld [vmem:[%s4 + $0x38] sm:$0xff]
  %v670 = vld [vmem:[%s4 + $0x40] sm:$0xff]
  %v671 = vld [vmem:[%s4 + $0x48] sm:$0xff]
  %v672 = vld [vmem:[%s4 + $0x50] sm:$0xff]
  %v673 = vld [vmem:[%s4 + $0x58] sm:$0xff]
  %v674 = vld [vmem:[%s4 + $0x60] sm:$0xff]
  %v675 = vld [vmem:[%s4 + $0x68] sm:$0xff]
  %v676 = vld [vmem:[%s4 + $0x70] sm:$0xff]
  %v677 = vld [vmem:[%s4 + $0x78] sm:$0xff]
  %v678 = vld [vmem:[%s4 + $0x80] sm:$0xff]
  %v679 = vld [vmem:[%s4 + $0x88] sm:$0xff]
  %v680 = vld [vmem:[%s4 + $0x90] sm:$0xff]
  %v681 = vld [vmem:[%s4 + $0x98] sm:$0xff]
  %v682 = vld [vmem:[%s4 + $0xa0] sm:$0xff]
  %v683 = vld [vmem:[%s4 + $0xa8] sm:$0xff]
  %v684 = vld [vmem:[%s4 + $0xb0] sm:$0xff]
  %v685 = vld [vmem:[%s4 + $0xb8] sm:$0xff]
  %v686 = vld [vmem:[%s4 + $0xc0] sm:$0xff]
  %v687 = vld [vmem:[%s4 + $0xc8] sm:$0xff]
  %v688 = vld [vmem:[%s4 + $0xd0] sm:$0xff]
  %v689 = vld [vmem:[%s4 + $0xd8] sm:$0xff]
  %v690 = vld [vmem:[%s4 + $0xe0] sm:$0xff]
  %v691 = vld [vmem:[%s4 + $0xe8] sm:$0xff]
  %v692 = vld [vmem:[%s4 + $0xf0] sm:$0xff]
  %v693 = vld [vmem:[%s4 + $0xf8] sm:$0xff]
  %v694 = vld [vmem:[%s4 + $0x100] sm:$0xff]
  %v695 = vld [vmem:[%s4 + $0x108] sm:$0xff]
  %v696 = vld [vmem:[%s4 + $0x110] sm:$0xff]
  %v697 = vld [vmem:[%s4 + $0x118] sm:$0xff]
  %v698 = vld [vmem:[%s4 + $0x120] sm:$0xff]
  %v699 = vld [vmem:[%s4 + $0x128] sm:$0xff]
  %v700 = vld [vmem:[%s4 + $0x130] sm:$0xff]
  %v701 = vld [vmem:[%s4 + $0x138] sm:$0xff]
  %v702 = vld [vmem:[%s4 + $0x140] sm:$0xff]
  %v703 = vld [vmem:[%s4 + $0x148] sm:$0xff]
  %v704 = vld [vmem:[%s4 + $0x150] sm:$0xff]
  %v705 = vld [vmem:[%s4 + $0x158] sm:$0xff]
  %v706 = vld [vmem:[%s4 + $0x160] sm:$0xff]
  %v707 = vld [vmem:[%s4 + $0x168] sm:$0xff]
  %v708 = vld [vmem:[%s4 + $0x170] sm:$0xff]
  %v709 = vld [vmem:[%s4 + $0x178] sm:$0xff]
  %v710 = vld [vmem:[%s4 + $0x180] sm:$0xff]
  %v711 = vld [vmem:[%s4 + $0x188] sm:$0xff]
  %v712 = vld [vmem:[%s4 + $0x190] sm:$0xff]
  %v713 = vld [vmem:[%s4 + $0x198] sm:$0xff]
  %v714 = vld [vmem:[%s4 + $0x1a0] sm:$0xff]
  %v715 = vld [vmem:[%s4 + $0x1a8] sm:$0xff]
  %v716 = vld [vmem:[%s4 + $0x1b0] sm:$0xff]
  %v717 = vld [vmem:[%s4 + $0x1b8] sm:$0xff]
  %v718 = vld [vmem:[%s4 + $0x1c0] sm:$0xff]
  %v719 = vld [vmem:[%s4 + $0x1c8] sm:$0xff]
  %v720 = vld [vmem:[%s4 + $0x1d0] sm:$0xff]
  %v721 = vld [vmem:[%s4 + $0x1d8] sm:$0xff]
  %v722 = vld [vmem:[%s4 + $0x1e0] sm:$0xff]
  %v723 = vld [vmem:[%s4 + $0x1e8] sm:$0xff]
  %v724 = vld [vmem:[%s4 + $0x1f0] sm:$0xff]
  %v725 = vld [vmem:[%s4 + $0x1f8] sm:$0xff]
  %v726 = vld [vmem:[%s0] sm:$0xff]
  %v727 = vpack.c.bf16 %v726, %v726
  %v728 = vld [vmem:[%s5] sm:$0xf]
  %v730 = vlaneseq
  %v731 = vshrl.u32 %v730, 7
  %v732 = vsub.s32 0, %v731
  %v733 = vrot.slane %v728, %v732
  %v734 = vlaneseq
  %v735 = vshrl.u32 %v734, 7
  %v736 = vsub.s32 1, %v735
  %v737 = vrot.slane %v728, %v736
  %v738 = vlaneseq
  %v739 = vshrl.u32 %v738, 7
  %v740 = vsub.s32 2, %v739
  %v741 = vrot.slane %v728, %v740
  %v742 = vlaneseq
  %v743 = vshrl.u32 %v742, 7
  %v744 = vsub.s32 3, %v743
  %v745 = vrot.slane %v728, %v744
  %v782 = vunpack.c.l.b16 %v662
  %v783 = vunpack.c.h.b16 %v662
  %v784 = vunpack.c.l.b16 %v663
  %v785 = vunpack.c.h.b16 %v663
  %v786 = vunpack.c.l.b16 %v664
  %v787 = vunpack.c.h.b16 %v664
  %v788 = vunpack.c.l.b16 %v665
  %v789 = vunpack.c.h.b16 %v665
  %v790 = vunpack.c.l.b16 %v666
  %v791 = vunpack.c.h.b16 %v666
  %v792 = vunpack.c.l.b16 %v667
  %v793 = vunpack.c.h.b16 %v667
  %v794 = vunpack.c.l.b16 %v668
  %v795 = vunpack.c.h.b16 %v668
  %v796 = vunpack.c.l.b16 %v669
  %v797 = vunpack.c.h.b16 %v669
  %v798 = vunpack.c.l.b16 %v670
  %v799 = vunpack.c.h.b16 %v670
  %v800 = vunpack.c.l.b16 %v671
  %v801 = vunpack.c.h.b16 %v671
  %v802 = vunpack.c.l.b16 %v672
  %v803 = vunpack.c.h.b16 %v672
  %v804 = vunpack.c.l.b16 %v673
  %v805 = vunpack.c.h.b16 %v673
  %v806 = vunpack.c.l.b16 %v674
  %v807 = vunpack.c.h.b16 %v674
  %v808 = vunpack.c.l.b16 %v675
  %v809 = vunpack.c.h.b16 %v675
  %v810 = vunpack.c.l.b16 %v676
  %v811 = vunpack.c.h.b16 %v676
  %v812 = vunpack.c.l.b16 %v677
  %v813 = vunpack.c.h.b16 %v677
  %v814 = vunpack.c.l.b16 %v678
  %v815 = vunpack.c.h.b16 %v678
  %v816 = vunpack.c.l.b16 %v679
  %v817 = vunpack.c.h.b16 %v679
  %v818 = vunpack.c.l.b16 %v680
  %v819 = vunpack.c.h.b16 %v680
  %v820 = vunpack.c.l.b16 %v681
  %v821 = vunpack.c.h.b16 %v681
  %v822 = vunpack.c.l.b16 %v682
  %v823 = vunpack.c.h.b16 %v682
  %v824 = vunpack.c.l.b16 %v683
  %v825 = vunpack.c.h.b16 %v683
  %v826 = vunpack.c.l.b16 %v684
  %v827 = vunpack.c.h.b16 %v684
  %v828 = vunpack.c.l.b16 %v685
  %v829 = vunpack.c.h.b16 %v685
  %v830 = vunpack.c.l.b16 %v686
  %v831 = vunpack.c.h.b16 %v686
  %v832 = vunpack.c.l.b16 %v687
  %v833 = vunpack.c.h.b16 %v687
  %v834 = vunpack.c.l.b16 %v688
  %v835 = vunpack.c.h.b16 %v688
  %v836 = vunpack.c.l.b16 %v689
  %v837 = vunpack.c.h.b16 %v689
  %v838 = vunpack.c.l.b16 %v690
  %v839 = vunpack.c.h.b16 %v690
  %v840 = vunpack.c.l.b16 %v691
  %v841 = vunpack.c.h.b16 %v691
  %v842 = vunpack.c.l.b16 %v692
  %v843 = vunpack.c.h.b16 %v692
  %v844 = vunpack.c.l.b16 %v693
  %v845 = vunpack.c.h.b16 %v693
  %v846 = vpack.c.b16 %v786, %v782
  %v847 = vpack.c.b16 %v787, %v783
  %v848 = vpack.c.b16 %v788, %v784
  %v849 = vpack.c.b16 %v789, %v785
  %v850 = vpack.c.b16 %v794, %v790
  %v851 = vpack.c.b16 %v795, %v791
  %v852 = vpack.c.b16 %v796, %v792
  %v853 = vpack.c.b16 %v797, %v793
  %v854 = vpack.c.b16 %v802, %v798
  %v855 = vpack.c.b16 %v803, %v799
  %v856 = vpack.c.b16 %v804, %v800
  %v857 = vpack.c.b16 %v805, %v801
  %v858 = vpack.c.b16 %v810, %v806
  %v859 = vpack.c.b16 %v811, %v807
  %v860 = vpack.c.b16 %v812, %v808
  %v861 = vpack.c.b16 %v813, %v809
  %v862 = vpack.c.b16 %v818, %v814
  %v863 = vpack.c.b16 %v819, %v815
  %v864 = vpack.c.b16 %v820, %v816
  %v865 = vpack.c.b16 %v821, %v817
  %v866 = vpack.c.b16 %v826, %v822
  %v867 = vpack.c.b16 %v827, %v823
  %v868 = vpack.c.b16 %v828, %v824
  %v869 = vpack.c.b16 %v829, %v825
  %v870 = vpack.c.b16 %v834, %v830
  %v871 = vpack.c.b16 %v835, %v831
  %v872 = vpack.c.b16 %v836, %v832
  %v873 = vpack.c.b16 %v837, %v833
  %v874 = vpack.c.b16 %v842, %v838
  %v875 = vpack.c.b16 %v843, %v839
  %v876 = vpack.c.b16 %v844, %v840
  %v877 = vpack.c.b16 %v845, %v841
  %910 = vmatprep.subr.bf16.mxu0 %v847
  %911 = vmatpush1.bf16.msra.mxu0 %v846
  %912 = vmatprep.subr.bf16.mxu0 %v851
  %913 = vmatpush1.bf16.msra.mxu0 %v850
  %914 = vmatprep.subr.bf16.mxu0 %v855
  %915 = vmatpush1.bf16.msra.mxu0 %v854
  %916 = vmatprep.subr.bf16.mxu0 %v859
  %917 = vmatpush1.bf16.msra.mxu0 %v858
  %918 = vmatprep.subr.bf16.mxu0 %v863
  %919 = vmatpush1.bf16.msra.mxu0 %v862
  %920 = vmatprep.subr.bf16.mxu0 %v867
  %921 = vmatpush1.bf16.msra.mxu0 %v866
  %922 = vmatprep.subr.bf16.mxu0 %v871
  %923 = vmatpush1.bf16.msra.mxu0 %v870
  %924 = vmatprep.subr.bf16.mxu0 %v875
  %925 = vmatpush1.bf16.msra.mxu0 %v874
  %926 = vmatprep.subr.bf16.mxu0 0
  %927 = vmatpush1.bf16.msra.mxu0 0
  %928 = vmatprep.subr.bf16.mxu0 0
  %929 = vmatpush1.bf16.msra.mxu0 0
  %930 = vmatprep.subr.bf16.mxu0 0
  %931 = vmatpush1.bf16.msra.mxu0 0
  %932 = vmatprep.subr.bf16.mxu0 0
  %933 = vmatpush1.bf16.msra.mxu0 0
  %934 = vmatprep.subr.bf16.mxu0 0
  %935 = vmatpush1.bf16.msra.mxu0 0
  %936 = vmatprep.subr.bf16.mxu0 0
  %937 = vmatpush1.bf16.msra.mxu0 0
  %938 = vmatprep.subr.bf16.mxu0 0
  %939 = vmatpush1.bf16.msra.mxu0 0
  %940 = vmatprep.subr.bf16.mxu0 0
  %941 = vmatpush1.bf16.msra.mxu0 0
  %942 = vmatprep.mubr.bf16.mxu0 0
  %943 = vmatmul.mubr.bf16.gmra.mrb[0].mxu0 %v727
  %v944 = vpop.f32.mrb[0].mxu0
  %v945 = vadd.f32 %v733, %v944
  %v946 = vpop.f32.mrb[0].mxu0
  %v947 = vadd.f32 %v737, %v946
  %v948 = vpop.f32.mrb[0].mxu0
  %v949 = vpop.f32.mrb[0].mxu0
  %950 = vdwg.mxu0
  %951 = vmatprep.subr.bf16.mxu0 %v849
  %952 = vmatpush1.bf16.msra.mxu0 %v848
  %953 = vmatprep.subr.bf16.mxu0 %v853
  %954 = vmatpush1.bf16.msra.mxu0 %v852
  %955 = vmatprep.subr.bf16.mxu0 %v857
  %956 = vmatpush1.bf16.msra.mxu0 %v856
  %957 = vmatprep.subr.bf16.mxu0 %v861
  %958 = vmatpush1.bf16.msra.mxu0 %v860
  %959 = vmatprep.subr.bf16.mxu0 %v865
  %960 = vmatpush1.bf16.msra.mxu0 %v864
  %961 = vmatprep.subr.bf16.mxu0 %v869
  %962 = vmatpush1.bf16.msra.mxu0 %v868
  %963 = vmatprep.subr.bf16.mxu0 %v873
  %964 = vmatpush1.bf16.msra.mxu0 %v872
  %965 = vmatprep.subr.bf16.mxu0 %v877
  %966 = vmatpush1.bf16.msra.mxu0 %v876
  %967 = vmatprep.subr.bf16.mxu0 0
  %968 = vmatpush1.bf16.msra.mxu0 0
  %969 = vmatprep.subr.bf16.mxu0 0
  %970 = vmatpush1.bf16.msra.mxu0 0
  %971 = vmatprep.subr.bf16.mxu0 0
  %972 = vmatpush1.bf16.msra.mxu0 0
  %973 = vmatprep.subr.bf16.mxu0 0
  %974 = vmatpush1.bf16.msra.mxu0 0
  %975 = vmatprep.subr.bf16.mxu0 0
  %976 = vmatpush1.bf16.msra.mxu0 0
  %977 = vmatprep.subr.bf16.mxu0 0
  %978 = vmatpush1.bf16.msra.mxu0 0
  %979 = vmatprep.subr.bf16.mxu0 0
  %980 = vmatpush1.bf16.msra.mxu0 0
  %981 = vmatprep.subr.bf16.mxu0 0
  %982 = vmatpush1.bf16.msra.mxu0 0
  %983 = vmatprep.mubr.bf16.mxu0 0
  %984 = vmatmul.mubr.bf16.gmra.mrb[0].mxu0 %v727
  %v985 = vpop.f32.mrb[0].mxu0
  %v986 = vadd.f32 %v741, %v985
  %v987 = vpop.f32.mrb[0].mxu0
  %v988 = vadd.f32 %v745, %v987
  %v989 = vpop.f32.mrb[0].mxu0
  %v990 = vpop.f32.mrb[0].mxu0
  %991 = vdwg.mxu0
  %992 = vst [vmem:[#allocation2] sm:$0xff] %v945
  %993 = vst [vmem:[#allocation2 + $0x8] sm:$0xff] %v947
  %994 = vst [vmem:[#allocation2 + $0x10] sm:$0xff] %v986
  %995 = vst [vmem:[#allocation2 + $0x18] sm:$0xff] %v988
  %v996 = vld [vmem:[#allocation2] sm:$0xff]
  %v997 = vld [vmem:[#allocation2 + $0x8] sm:$0xff]
  %v998 = vld [vmem:[#allocation2 + $0x10] sm:$0xff]
  %v999 = vld [vmem:[#allocation2 + $0x18] sm:$0xff]
  %v1032 = vunpack.c.l.b16 %v694
  %v1033 = vunpack.c.h.b16 %v694
  %v1034 = vunpack.c.l.b16 %v695
  %v1035 = vunpack.c.h.b16 %v695
  %v1036 = vunpack.c.l.b16 %v696
  %v1037 = vunpack.c.h.b16 %v696
  %v1038 = vunpack.c.l.b16 %v697
  %v1039 = vunpack.c.h.b16 %v697
  %v1040 = vunpack.c.l.b16 %v698
  %v1041 = vunpack.c.h.b16 %v698
  %v1042 = vunpack.c.l.b16 %v699
  %v1043 = vunpack.c.h.b16 %v699
  %v1044 = vunpack.c.l.b16 %v700
  %v1045 = vunpack.c.h.b16 %v700
  %v1046 = vunpack.c.l.b16 %v701
  %v1047 = vunpack.c.h.b16 %v701
  %v1048 = vunpack.c.l.b16 %v702
  %v1049 = vunpack.c.h.b16 %v702
  %v1050 = vunpack.c.l.b16 %v703
  %v1051 = vunpack.c.h.b16 %v703
  %v1052 = vunpack.c.l.b16 %v704
  %v1053 = vunpack.c.h.b16 %v704
  %v1054 = vunpack.c.l.b16 %v705
  %v1055 = vunpack.c.h.b16 %v705
  %v1056 = vunpack.c.l.b16 %v706
  %v1057 = vunpack.c.h.b16 %v706
  %v1058 = vunpack.c.l.b16 %v707
  %v1059 = vunpack.c.h.b16 %v707
  %v1060 = vunpack.c.l.b16 %v708
  %v1061 = vunpack.c.h.b16 %v708
  %v1062 = vunpack.c.l.b16 %v709
  %v1063 = vunpack.c.h.b16 %v709
  %v1064 = vunpack.c.l.b16 %v710
  %v1065 = vunpack.c.h.b16 %v710
  %v1066 = vunpack.c.l.b16 %v711
  %v1067 = vunpack.c.h.b16 %v711
  %v1068 = vunpack.c.l.b16 %v712
  %v1069 = vunpack.c.h.b16 %v712
  %v1070 = vunpack.c.l.b16 %v713
  %v1071 = vunpack.c.h.b16 %v713
  %v1072 = vunpack.c.l.b16 %v714
  %v1073 = vunpack.c.h.b16 %v714
  %v1074 = vunpack.c.l.b16 %v715
  %v1075 = vunpack.c.h.b16 %v715
  %v1076 = vunpack.c.l.b16 %v716
  %v1077 = vunpack.c.h.b16 %v716
  %v1078 = vunpack.c.l.b16 %v717
  %v1079 = vunpack.c.h.b16 %v717
  %v1080 = vunpack.c.l.b16 %v718
  %v1081 = vunpack.c.h.b16 %v718
  %v1082 = vunpack.c.l.b16 %v719
  %v1083 = vunpack.c.h.b16 %v719
  %v1084 = vunpack.c.l.b16 %v720
  %v1085 = vunpack.c.h.b16 %v720
  %v1086 = vunpack.c.l.b16 %v721
  %v1087 = vunpack.c.h.b16 %v721
  %v1088 = vunpack.c.l.b16 %v722
  %v1089 = vunpack.c.h.b16 %v722
  %v1090 = vunpack.c.l.b16 %v723
  %v1091 = vunpack.c.h.b16 %v723
  %v1092 = vunpack.c.l.b16 %v724
  %v1093 = vunpack.c.h.b16 %v724
  %v1094 = vunpack.c.l.b16 %v725
  %v1095 = vunpack.c.h.b16 %v725
  %v1096 = vpack.c.b16 %v1036, %v1032
  %v1097 = vpack.c.b16 %v1037, %v1033
  %v1098 = vpack.c.b16 %v1038, %v1034
  %v1099 = vpack.c.b16 %v1039, %v1035
  %v1100 = vpack.c.b16 %v1044, %v1040
  %v1101 = vpack.c.b16 %v1045, %v1041
  %v1102 = vpack.c.b16 %v1046, %v1042
  %v1103 = vpack.c.b16 %v1047, %v1043
  %v1104 = vpack.c.b16 %v1052, %v1048
  %v1105 = vpack.c.b16 %v1053, %v1049
  %v1106 = vpack.c.b16 %v1054, %v1050
  %v1107 = vpack.c.b16 %v1055, %v1051
  %v1108 = vpack.c.b16 %v1060, %v1056
  %v1109 = vpack.c.b16 %v1061, %v1057
  %v1110 = vpack.c.b16 %v1062, %v1058
  %v1111 = vpack.c.b16 %v1063, %v1059
  %v1112 = vpack.c.b16 %v1068, %v1064
  %v1113 = vpack.c.b16 %v1069, %v1065
  %v1114 = vpack.c.b16 %v1070, %v1066
  %v1115 = vpack.c.b16 %v1071, %v1067
  %v1116 = vpack.c.b16 %v1076, %v1072
  %v1117 = vpack.c.b16 %v1077, %v1073
  %v1118 = vpack.c.b16 %v1078, %v1074
  %v1119 = vpack.c.b16 %v1079, %v1075
  %v1120 = vpack.c.b16 %v1084, %v1080
  %v1121 = vpack.c.b16 %v1085, %v1081
  %v1122 = vpack.c.b16 %v1086, %v1082
  %v1123 = vpack.c.b16 %v1087, %v1083
  %v1124 = vpack.c.b16 %v1092, %v1088
  %v1125 = vpack.c.b16 %v1093, %v1089
  %v1126 = vpack.c.b16 %v1094, %v1090
  %v1127 = vpack.c.b16 %v1095, %v1091
  %1160 = vmatprep.subr.bf16.mxu0 %v1097
  %1161 = vmatpush1.bf16.msra.mxu0 %v1096
  %1162 = vmatprep.subr.bf16.mxu0 %v1101
  %1163 = vmatpush1.bf16.msra.mxu0 %v1100
  %1164 = vmatprep.subr.bf16.mxu0 %v1105
  %1165 = vmatpush1.bf16.msra.mxu0 %v1104
  %1166 = vmatprep.subr.bf16.mxu0 %v1109
  %1167 = vmatpush1.bf16.msra.mxu0 %v1108
  %1168 = vmatprep.subr.bf16.mxu0 %v1113
  %1169 = vmatpush1.bf16.msra.mxu0 %v1112
  %1170 = vmatprep.subr.bf16.mxu0 %v1117
  %1171 = vmatpush1.bf16.msra.mxu0 %v1116
  %1172 = vmatprep.subr.bf16.mxu0 %v1121
  %1173 = vmatpush1.bf16.msra.mxu0 %v1120
  %1174 = vmatprep.subr.bf16.mxu0 %v1125
  %1175 = vmatpush1.bf16.msra.mxu0 %v1124
  %1176 = vmatprep.subr.bf16.mxu0 0
  %1177 = vmatpush1.bf16.msra.mxu0 0
  %1178 = vmatprep.subr.bf16.mxu0 0
  %1179 = vmatpush1.bf16.msra.mxu0 0
  %1180 = vmatprep.subr.bf16.mxu0 0
  %1181 = vmatpush1.bf16.msra.mxu0 0
  %1182 = vmatprep.subr.bf16.mxu0 0
  %1183 = vmatpush1.bf16.msra.mxu0 0
  %1184 = vmatprep.subr.bf16.mxu0 0
  %1185 = vmatpush1.bf16.msra.mxu0 0
  %1186 = vmatprep.subr.bf16.mxu0 0
  %1187 = vmatpush1.bf16.msra.mxu0 0
  %1188 = vmatprep.subr.bf16.mxu0 0
  %1189 = vmatpush1.bf16.msra.mxu0 0
  %1190 = vmatprep.subr.bf16.mxu0 0
  %1191 = vmatpush1.bf16.msra.mxu0 0
  %1192 = vmatprep.mubr.bf16.mxu0 0
  %1193 = vmatmul.mubr.bf16.gmra.mrb[0].mxu0 0
  %v1194 = vpop.f32.mrb[0].mxu0
  %v1195 = vadd.f32 0.0, %v1194
  %v1196 = vpop.f32.mrb[0].mxu0
  %v1197 = vadd.f32 0.0, %v1196
  %v1198 = vpop.f32.mrb[0].mxu0
  %v1199 = vpop.f32.mrb[0].mxu0
  %1200 = vdwg.mxu0
  %1201 = vmatprep.subr.bf16.mxu0 %v1099
  %1202 = vmatpush1.bf16.msra.mxu0 %v1098
  %1203 = vmatprep.subr.bf16.mxu0 %v1103
  %1204 = vmatpush1.bf16.msra.mxu0 %v1102
  %1205 = vmatprep.subr.bf16.mxu0 %v1107
  %1206 = vmatpush1.bf16.msra.mxu0 %v1106
  %1207 = vmatprep.subr.bf16.mxu0 %v1111
  %1208 = vmatpush1.bf16.msra.mxu0 %v1110
  %1209 = vmatprep.subr.bf16.mxu0 %v1115
  %1210 = vmatpush1.bf16.msra.mxu0 %v1114
  %1211 = vmatprep.subr.bf16.mxu0 %v1119
  %1212 = vmatpush1.bf16.msra.mxu0 %v1118
  %1213 = vmatprep.subr.bf16.mxu0 %v1123
  %1214 = vmatpush1.bf16.msra.mxu0 %v1122
  %1215 = vmatprep.subr.bf16.mxu0 %v1127
  %1216 = vmatpush1.bf16.msra.mxu0 %v1126
  %1217 = vmatprep.subr.bf16.mxu0 0
  %1218 = vmatpush1.bf16.msra.mxu0 0
  %1219 = vmatprep.subr.bf16.mxu0 0
  %1220 = vmatpush1.bf16.msra.mxu0 0
  %1221 = vmatprep.subr.bf16.mxu0 0
  %1222 = vmatpush1.bf16.msra.mxu0 0
  %1223 = vmatprep.subr.bf16.mxu0 0
  %1224 = vmatpush1.bf16.msra.mxu0 0
  %1225 = vmatprep.subr.bf16.mxu0 0
  %1226 = vmatpush1.bf16.msra.mxu0 0
  %1227 = vmatprep.subr.bf16.mxu0 0
  %1228 = vmatpush1.bf16.msra.mxu0 0
  %1229 = vmatprep.subr.bf16.mxu0 0
  %1230 = vmatpush1.bf16.msra.mxu0 0
  %1231 = vmatprep.subr.bf16.mxu0 0
  %1232 = vmatpush1.bf16.msra.mxu0 0
  %1233 = vmatprep.mubr.bf16.mxu0 0
  %1234 = vmatmul.mubr.bf16.gmra.mrb[0].mxu0 0
  %v1235 = vpop.f32.mrb[0].mxu0
  %v1236 = vadd.f32 0.0, %v1235
  %v1237 = vpop.f32.mrb[0].mxu0
  %v1238 = vadd.f32 0.0, %v1237
  %v1239 = vpop.f32.mrb[0].mxu0
  %v1240 = vpop.f32.mrb[0].mxu0
  %1241 = vdwg.mxu0
  %v1242 = vadd.f32 %v996, %v1195
  %v1243 = vadd.f32 %v997, %v1197
  %v1244 = vadd.f32 %v998, %v1236
  %v1245 = vadd.f32 %v999, %v1238
  %v1246 = vmul.f32 %v1242, 0.5
  %v1247 = vtanh.pop %v1246
  %v1248 = vmul.f32 %v1247, 0.5
  %v1249 = vadd.f32 %v1248, 0.5
  %v1250 = vmul.f32 %v1243, 0.5
  %v1251 = vtanh.pop %v1250
  %v1252 = vmul.f32 %v1251, 0.5
  %v1253 = vadd.f32 %v1252, 0.5
  %v1254 = vtanh.pop %v1244
  %v1255 = vmul.f32 %v1245, 0.5
  %v1256 = vtanh.pop %v1255
  %v1257 = vmul.f32 %v1256, 0.5
  %v1258 = vadd.f32 %v1257, 0.5
  %v1259 = vmul.f32 %v1253, 0.0
  %v1260 = vmul.f32 %v1249, %v1254
  %v1261 = vadd.f32 %v1259, %v1260
  %v1262 = vtanh.pop %v1261
  %v1263 = vmul.f32 %v1258, %v1262
  %1264 = vst [vmem:[#allocation3] sm:$0xff] %v1263
  %v1265 = vld [vmem:[#allocation2 + $0x20] sm:$0xff]
  %v1266 = vld [vmem:[#allocation2 + $0x28] sm:$0xff]
  %v1267 = vld [vmem:[#allocation2 + $0x30] sm:$0xff]
  %v1268 = vld [vmem:[#allocation2 + $0x38] sm:$0xff]
  %v1269 = vpack.c.bf16 %v1263, %v1263
  %1270 = vmatprep.subr.bf16.mxu0 %v1097
  %1271 = vmatpush1.bf16.msra.mxu0 %v1096
  %1272 = vmatprep.subr.bf16.mxu0 %v1101
  %1273 = vmatpush1.bf16.msra.mxu0 %v1100
  %1274 = vmatprep.subr.bf16.mxu0 %v1105
  %1275 = vmatpush1.bf16.msra.mxu0 %v1104
  %1276 = vmatprep.subr.bf16.mxu0 %v1109
  %1277 = vmatpush1.bf16.msra.mxu0 %v1108
  %1278 = vmatprep.subr.bf16.mxu0 %v1113
  %1279 = vmatpush1.bf16.msra.mxu0 %v1112
  %1280 = vmatprep.subr.bf16.mxu0 %v1117
  %1281 = vmatpush1.bf16.msra.mxu0 %v1116
  %1282 = vmatprep.subr.bf16.mxu0 %v1121
  %1283 = vmatpush1.bf16.msra.mxu0 %v1120
  %1284 = vmatprep.subr.bf16.mxu0 %v1125
  %1285 = vmatpush1.bf16.msra.mxu0 %v1124
  %1286 = vmatprep.subr.bf16.mxu0 0
  %1287 = vmatpush1.bf16.msra.mxu0 0
  %1288 = vmatprep.subr.bf16.mxu0 0
  %1289 = vmatpush1.bf16.msra.mxu0 0
  %1290 = vmatprep.subr.bf16.mxu0 0
  %1291 = vmatpush1.bf16.msra.mxu0 0
  %1292 = vmatprep.subr.bf16.mxu0 0
  %1293 = vmatpush1.bf16.msra.mxu0 0
  %1294 = vmatprep.subr.bf16.mxu0 0
  %1295 = vmatpush1.bf16.msra.mxu0 0
  %1296 = vmatprep.subr.bf16.mxu0 0
  %1297 = vmatpush1.bf16.msra.mxu0 0
  %1298 = vmatprep.subr.bf16.mxu0 0
  %1299 = vmatpush1.bf16.msra.mxu0 0
  %1300 = vmatprep.subr.bf16.mxu0 0
  %1301 = vmatpush1.bf16.msra.mxu0 0
  %1302 = vmatprep.mubr.bf16.mxu0 0
  %1303 = vmatmul.mubr.bf16.gmra.mrb[0].mxu0 %v1269
  %v1304 = vpop.f32.mrb[0].mxu0
  %v1305 = vadd.f32 0.0, %v1304
  %v1306 = vpop.f32.mrb[0].mxu0
  %v1307 = vadd.f32 0.0, %v1306
  %v1308 = vpop.f32.mrb[0].mxu0
  %v1309 = vpop.f32.mrb[0].mxu0
  %1310 = vdwg.mxu0
  %1311 = vmatprep.subr.bf16.mxu0 %v1099
  %1312 = vmatpush1.bf16.msra.mxu0 %v1098
  %1313 = vmatprep.subr.bf16.mxu0 %v1103
  %1314 = vmatpush1.bf16.msra.mxu0 %v1102
  %1315 = vmatprep.subr.bf16.mxu0 %v1107
  %1316 = vmatpush1.bf16.msra.mxu0 %v1106
  %1317 = vmatprep.subr.bf16.mxu0 %v1111
  %1318 = vmatpush1.bf16.msra.mxu0 %v1110
  %1319 = vmatprep.subr.bf16.mxu0 %v1115
  %1320 = vmatpush1.bf16.msra.mxu0 %v1114
  %1321 = vmatprep.subr.bf16.mxu0 %v1119
  %1322 = vmatpush1.bf16.msra.mxu0 %v1118
  %1323 = vmatprep.subr.bf16.mxu0 %v1123
  %1324 = vmatpush1.bf16.msra.mxu0 %v1122
  %1325 = vmatprep.subr.bf16.mxu0 %v1127
  %1326 = vmatpush1.bf16.msra.mxu0 %v1126
  %1327 = vmatprep.subr.bf16.mxu0 0
  %1328 = vmatpush1.bf16.msra.mxu0 0
  %1329 = vmatprep.subr.bf16.mxu0 0
  %1330 = vmatpush1.bf16.msra.mxu0 0
  %1331 = vmatprep.subr.bf16.mxu0 0
  %1332 = vmatpush1.bf16.msra.mxu0 0
  %1333 = vmatprep.subr.bf16.mxu0 0
  %1334 = vmatpush1.bf16.msra.mxu0 0
  %1335 = vmatprep.subr.bf16.mxu0 0
  %1336 = vmatpush1.bf16.msra.mxu0 0
  %1337 = vmatprep.subr.bf16.mxu0 0
  %1338 = vmatpush1.bf16.msra.mxu0 0
  %1339 = vmatprep.subr.bf16.mxu0 0
  %1340 = vmatpush1.bf16.msra.mxu0 0
  %1341 = vmatprep.subr.bf16.mxu0 0
  %1342 = vmatpush1.bf16.msra.mxu0 0
  %1343 = vmatprep.mubr.bf16.mxu0 0
  %1344 = vmatmul.mubr.bf16.gmra.mrb[0].mxu0 %v1269
  %v1345 = vpop.f32.mrb[0].mxu0
  %v1346 = vadd.f32 0.0, %v1345
  %v1347 = vpop.f32.mrb[0].mxu0
  %v1348 = vadd.f32 0.0, %v1347
  %v1349 = vpop.f32.mrb[0].mxu0
  %v1350 = vpop.f32.mrb[0].mxu0
  %1351 = vdwg.mxu0
  %v1352 = vadd.f32 %v1265, %v1305
  %v1353 = vadd.f32 %v1266, %v1307
  %v1354 = vadd.f32 %v1267, %v1346
  %v1355 = vadd.f32 %v1268, %v1348
  %v1356 = vmul.f32 %v1352, 0.5
  %v1357 = vtanh.pop %v1356
  %v1358 = vmul.f32 %v1357, 0.5
  %v1359 = vadd.f32 %v1358, 0.5
  %v1360 = vmul.f32 %v1353, 0.5
  %v1361 = vtanh.pop %v1360
  %v1362 = vmul.f32 %v1361, 0.5
  %v1363 = vadd.f32 %v1362, 0.5
  %v1364 = vtanh.pop %v1354
  %v1365 = vmul.f32 %v1355, 0.5
  %v1366 = vtanh.pop %v1365
  %v1367 = vmul.f32 %v1366, 0.5
  %v1368 = vadd.f32 %v1367, 0.5
  %v1369 = vmul.f32 %v1363, %v1261
  %v1370 = vmul.f32 %v1359, %v1364
  %v1371 = vadd.f32 %v1369, %v1370
  %v1372 = vtanh.pop %v1371
  %v1373 = vmul.f32 %v1368, %v1372
  %1374 = vst [vmem:[#allocation3 + $0x8] sm:$0xff] %v1373
  %v1375 = vld [vmem:[#allocation2 + $0x40] sm:$0xff]
  %v1376 = vld [vmem:[#allocation2 + $0x48] sm:$0xff]
  %v1377 = vld [vmem:[#allocation2 + $0x50] sm:$0xff]
  %v1378 = vld [vmem:[#allocation2 + $0x58] sm:$0xff]
  %v1379 = vpack.c.bf16 %v1373, %v1373
  %1380 = vmatprep.subr.bf16.mxu0 %v1097
  %1381 = vmatpush1.bf16.msra.mxu0 %v1096
  %1382 = vmatprep.subr.bf16.mxu0 %v1101
  %1383 = vmatpush1.bf16.msra.mxu0 %v1100
  %1384 = vmatprep.subr.bf16.mxu0 %v1105
  %1385 = vmatpush1.bf16.msra.mxu0 %v1104
  %1386 = vmatprep.subr.bf16.mxu0 %v1109
  %1387 = vmatpush1.bf16.msra.mxu0 %v1108
  %1388 = vmatprep.subr.bf16.mxu0 %v1113
  %1389 = vmatpush1.bf16.msra.mxu0 %v1112
  %1390 = vmatprep.subr.bf16.mxu0 %v1117
  %1391 = vmatpush1.bf16.msra.mxu0 %v1116
  %1392 = vmatprep.subr.bf16.mxu0 %v1121
  %1393 = vmatpush1.bf16.msra.mxu0 %v1120
  %1394 = vmatprep.subr.bf16.mxu0 %v1125
  %1395 = vmatpush1.bf16.msra.mxu0 %v1124
  %1396 = vmatprep.subr.bf16.mxu0 0
  %1397 = vmatpush1.bf16.msra.mxu0 0
  %1398 = vmatprep.subr.bf16.mxu0 0
  %1399 = vmatpush1.bf16.msra.mxu0 0
  %1400 = vmatprep.subr.bf16.mxu0 0
  %1401 = vmatpush1.bf16.msra.mxu0 0
  %1402 = vmatprep.subr.bf16.mxu0 0
  %1403 = vmatpush1.bf16.msra.mxu0 0
  %1404 = vmatprep.subr.bf16.mxu0 0
  %1405 = vmatpush1.bf16.msra.mxu0 0
  %1406 = vmatprep.subr.bf16.mxu0 0
  %1407 = vmatpush1.bf16.msra.mxu0 0
  %1408 = vmatprep.subr.bf16.mxu0 0
  %1409 = vmatpush1.bf16.msra.mxu0 0
  %1410 = vmatprep.subr.bf16.mxu0 0
  %1411 = vmatpush1.bf16.msra.mxu0 0
  %1412 = vmatprep.mubr.bf16.mxu0 0
  %1413 = vmatmul.mubr.bf16.gmra.mrb[0].mxu0 %v1379
  %v1414 = vpop.f32.mrb[0].mxu0
  %v1415 = vadd.f32 0.0, %v1414
  %v1416 = vpop.f32.mrb[0].mxu0
  %v1417 = vadd.f32 0.0, %v1416
  %v1418 = vpop.f32.mrb[0].mxu0
  %v1419 = vpop.f32.mrb[0].mxu0
  %1420 = vdwg.mxu0
  %1421 = vmatprep.subr.bf16.mxu0 %v1099
  %1422 = vmatpush1.bf16.msra.mxu0 %v1098
  %1423 = vmatprep.subr.bf16.mxu0 %v1103
  %1424 = vmatpush1.bf16.msra.mxu0 %v1102
  %1425 = vmatprep.subr.bf16.mxu0 %v1107
  %1426 = vmatpush1.bf16.msra.mxu0 %v1106
  %1427 = vmatprep.subr.bf16.mxu0 %v1111
  %1428 = vmatpush1.bf16.msra.mxu0 %v1110
  %1429 = vmatprep.subr.bf16.mxu0 %v1115
  %1430 = vmatpush1.bf16.msra.mxu0 %v1114
  %1431 = vmatprep.subr.bf16.mxu0 %v1119
  %1432 = vmatpush1.bf16.msra.mxu0 %v1118
  %1433 = vmatprep.subr.bf16.mxu0 %v1123
  %1434 = vmatpush1.bf16.msra.mxu0 %v1122
  %1435 = vmatprep.subr.bf16.mxu0 %v1127
  %1436 = vmatpush1.bf16.msra.mxu0 %v1126
  %1437 = vmatprep.subr.bf16.mxu0 0
  %1438 = vmatpush1.bf16.msra.mxu0 0
  %1439 = vmatprep.subr.bf16.mxu0 0
  %1440 = vmatpush1.bf16.msra.mxu0 0
  %1441 = vmatprep.subr.bf16.mxu0 0
  %1442 = vmatpush1.bf16.msra.mxu0 0
  %1443 = vmatprep.subr.bf16.mxu0 0
  %1444 = vmatpush1.bf16.msra.mxu0 0
  %1445 = vmatprep.subr.bf16.mxu0 0
  %1446 = vmatpush1.bf16.msra.mxu0 0
  %1447 = vmatprep.subr.bf16.mxu0 0
  %1448 = vmatpush1.bf16.msra.mxu0 0
  %1449 = vmatprep.subr.bf16.mxu0 0
  %1450 = vmatpush1.bf16.msra.mxu0 0
  %1451 = vmatprep.subr.bf16.mxu0 0
  %1452 = vmatpush1.bf16.msra.mxu0 0
  %1453 = vmatprep.mubr.bf16.mxu0 0
  %1454 = vmatmul.mubr.bf16.gmra.mrb[0].mxu0 %v1379
  %v1455 = vpop.f32.mrb[0].mxu0
  %v1456 = vadd.f32 0.0, %v1455
  %v1457 = vpop.f32.mrb[0].mxu0
  %v1458 = vadd.f32 0.0, %v1457
  %v1459 = vpop.f32.mrb[0].mxu0
  %v1460 = vpop.f32.mrb[0].mxu0
  %1461 = vdwg.mxu0
  %v1462 = vadd.f32 %v1375, %v1415
  %v1463 = vadd.f32 %v1376, %v1417
  %v1464 = vadd.f32 %v1377, %v1456
  %v1465 = vadd.f32 %v1378, %v1458
  %v1466 = vmul.f32 %v1462, 0.5
  %v1467 = vtanh.pop %v1466
  %v1468 = vmul.f32 %v1467, 0.5
  %v1469 = vadd.f32 %v1468, 0.5
  %v1470 = vmul.f32 %v1463, 0.5
  %v1471 = vtanh.pop %v1470
  %v1472 = vmul.f32 %v1471, 0.5
  %v1473 = vadd.f32 %v1472, 0.5
  %v1474 = vtanh.pop %v1464
  %v1475 = vmul.f32 %v1465, 0.5
  %v1476 = vtanh.pop %v1475
  %v1477 = vmul.f32 %v1476, 0.5
  %v1478 = vadd.f32 %v1477, 0.5
  %v1479 = vmul.f32 %v1473, %v1371
  %v1480 = vmul.f32 %v1469, %v1474
  %v1481 = vadd.f32 %v1479, %v1480
  %v1482 = vtanh.pop %v1481
  %v1483 = vmul.f32 %v1478, %v1482
  %1484 = vst [vmem:[#allocation3 + $0x10] sm:$0xff] %v1483
  %v1485 = vld [vmem:[#allocation2 + $0x60] sm:$0xff]
  %v1486 = vld [vmem:[#allocation2 + $0x68] sm:$0xff]
  %v1487 = vld [vmem:[#allocation2 + $0x70] sm:$0xff]
  %v1488 = vld [vmem:[#allocation2 + $0x78] sm:$0xff]
  %v1489 = vpack.c.bf16 %v1483, %v1483
  %1490 = vmatprep.subr.bf16.mxu0 %v1097
  %1491 = vmatpush1.bf16.msra.mxu0 %v1096
  %1492 = vmatprep.subr.bf16.mxu0 %v1101
  %1493 = vmatpush1.bf16.msra.mxu0 %v1100
  %1494 = vmatprep.subr.bf16.mxu0 %v1105
  %1495 = vmatpush1.bf16.msra.mxu0 %v1104
  %1496 = vmatprep.subr.bf16.mxu0 %v1109
  %1497 = vmatpush1.bf16.msra.mxu0 %v1108
  %1498 = vmatprep.subr.bf16.mxu0 %v1113
  %1499 = vmatpush1.bf16.msra.mxu0 %v1112
  %1500 = vmatprep.subr.bf16.mxu0 %v1117
  %1501 = vmatpush1.bf16.msra.mxu0 %v1116
  %1502 = vmatprep.subr.bf16.mxu0 %v1121
  %1503 = vmatpush1.bf16.msra.mxu0 %v1120
  %1504 = vmatprep.subr.bf16.mxu0 %v1125
  %1505 = vmatpush1.bf16.msra.mxu0 %v1124
  %1506 = vmatprep.subr.bf16.mxu0 0
  %1507 = vmatpush1.bf16.msra.mxu0 0
  %1508 = vmatprep.subr.bf16.mxu0 0
  %1509 = vmatpush1.bf16.msra.mxu0 0
  %1510 = vmatprep.subr.bf16.mxu0 0
  %1511 = vmatpush1.bf16.msra.mxu0 0
  %1512 = vmatprep.subr.bf16.mxu0 0
  %1513 = vmatpush1.bf16.msra.mxu0 0
  %1514 = vmatprep.subr.bf16.mxu0 0
  %1515 = vmatpush1.bf16.msra.mxu0 0
  %1516 = vmatprep.subr.bf16.mxu0 0
  %1517 = vmatpush1.bf16.msra.mxu0 0
  %1518 = vmatprep.subr.bf16.mxu0 0
  %1519 = vmatpush1.bf16.msra.mxu0 0
  %1520 = vmatprep.subr.bf16.mxu0 0
  %1521 = vmatpush1.bf16.msra.mxu0 0
  %1522 = vmatprep.mubr.bf16.mxu0 0
  %1523 = vmatmul.mubr.bf16.gmra.mrb[0].mxu0 %v1489
  %v1524 = vpop.f32.mrb[0].mxu0
  %v1525 = vadd.f32 0.0, %v1524
  %v1526 = vpop.f32.mrb[0].mxu0
  %v1527 = vadd.f32 0.0, %v1526
  %v1528 = vpop.f32.mrb[0].mxu0
  %v1529 = vpop.f32.mrb[0].mxu0
  %1530 = vdwg.mxu0
  %1531 = vmatprep.subr.bf16.mxu0 %v1099
  %1532 = vmatpush1.bf16.msra.mxu0 %v1098
  %1533 = vmatprep.subr.bf16.mxu0 %v1103
  %1534 = vmatpush1.bf16.msra.mxu0 %v1102
  %1535 = vmatprep.subr.bf16.mxu0 %v1107
  %1536 = vmatpush1.bf16.msra.mxu0 %v1106
  %1537 = vmatprep.subr.bf16.mxu0 %v1111
  %1538 = vmatpush1.bf16.msra.mxu0 %v1110
  %1539 = vmatprep.subr.bf16.mxu0 %v1115
  %1540 = vmatpush1.bf16.msra.mxu0 %v1114
  %1541 = vmatprep.subr.bf16.mxu0 %v1119
  %1542 = vmatpush1.bf16.msra.mxu0 %v1118
  %1543 = vmatprep.subr.bf16.mxu0 %v1123
  %1544 = vmatpush1.bf16.msra.mxu0 %v1122
  %1545 = vmatprep.subr.bf16.mxu0 %v1127
  %1546 = vmatpush1.bf16.msra.mxu0 %v1126
  %1547 = vmatprep.subr.bf16.mxu0 0
  %1548 = vmatpush1.bf16.msra.mxu0 0
  %1549 = vmatprep.subr.bf16.mxu0 0
  %1550 = vmatpush1.bf16.msra.mxu0 0
  %1551 = vmatprep.subr.bf16.mxu0 0
  %1552 = vmatpush1.bf16.msra.mxu0 0
  %1553 = vmatprep.subr.bf16.mxu0 0
  %1554 = vmatpush1.bf16.msra.mxu0 0
  %1555 = vmatprep.subr.bf16.mxu0 0
  %1556 = vmatpush1.bf16.msra.mxu0 0
  %1557 = vmatprep.subr.bf16.mxu0 0
  %1558 = vmatpush1.bf16.msra.mxu0 0
  %1559 = vmatprep.subr.bf16.mxu0 0
  %1560 = vmatpush1.bf16.msra.mxu0 0
  %1561 = vmatprep.subr.bf16.mxu0 0
  %1562 = vmatpush1.bf16.msra.mxu0 0
  %1563 = vmatprep.mubr.bf16.mxu0 0
  %1564 = vmatmul.mubr.bf16.gmra.mrb[0].mxu0 %v1489
  %v1565 = vpop.f32.mrb[0].mxu0
  %v1566 = vadd.f32 0.0, %v1565
  %v1567 = vpop.f32.mrb[0].mxu0
  %v1568 = vadd.f32 0.0, %v1567
  %v1569 = vpop.f32.mrb[0].mxu0
  %v1570 = vpop.f32.mrb[0].mxu0
  %1571 = vdwg.mxu0
  %v1572 = vadd.f32 %v1485, %v1525
  %v1573 = vadd.f32 %v1486, %v1527
  %v1574 = vadd.f32 %v1487, %v1566
  %v1575 = vadd.f32 %v1488, %v1568
  %v1576 = vmul.f32 %v1572, 0.5
  %v1577 = vtanh.pop %v1576
  %v1578 = vmul.f32 %v1577, 0.5
  %v1579 = vadd.f32 %v1578, 0.5
  %v1580 = vmul.f32 %v1573, 0.5
  %v1581 = vtanh.pop %v1580
  %v1582 = vmul.f32 %v1581, 0.5
  %v1583 = vadd.f32 %v1582, 0.5
  %v1584 = vtanh.pop %v1574
  %v1585 = vmul.f32 %v1575, 0.5
  %v1586 = vtanh.pop %v1585
  %v1587 = vmul.f32 %v1586, 0.5
  %v1588 = vadd.f32 %v1587, 0.5
  %v1589 = vmul.f32 %v1583, %v1481
  %v1590 = vmul.f32 %v1579, %v1584
  %v1591 = vadd.f32 %v1589, %v1590
  %v1592 = vtanh.pop %v1591
  %v1593 = vmul.f32 %v1588, %v1592
  %1594 = vst [vmem:[#allocation3 + $0x18] sm:$0xff] %v1593
  %v1595 = vld [vmem:[#allocation2 + $0x80] sm:$0xff]
  %v1596 = vld [vmem:[#allocation2 + $0x88] sm:$0xff]
  %v1597 = vld [vmem:[#allocation2 + $0x90] sm:$0xff]
  %v1598 = vld [vmem:[#allocation2 + $0x98] sm:$0xff]
  %v1599 = vpack.c.bf16 %v1593, %v1593
  %1600 = vmatprep.subr.bf16.mxu0 %v1097
  %1601 = vmatpush1.bf16.msra.mxu0 %v1096
  %1602 = vmatprep.subr.bf16.mxu0 %v1101
  %1603 = vmatpush1.bf16.msra.mxu0 %v1100
  %1604 = vmatprep.subr.bf16.mxu0 %v1105
  %1605 = vmatpush1.bf16.msra.mxu0 %v1104
  %1606 = vmatprep.subr.bf16.mxu0 %v1109
  %1607 = vmatpush1.bf16.msra.mxu0 %v1108
  %1608 = vmatprep.subr.bf16.mxu0 %v1113
  %1609 = vmatpush1.bf16.msra.mxu0 %v1112
  %1610 = vmatprep.subr.bf16.mxu0 %v1117
  %1611 = vmatpush1.bf16.msra.mxu0 %v1116
  %1612 = vmatprep.subr.bf16.mxu0 %v1121
  %1613 = vmatpush1.bf16.msra.mxu0 %v1120
  %1614 = vmatprep.subr.bf16.mxu0 %v1125
  %1615 = vmatpush1.bf16.msra.mxu0 %v1124
  %1616 = vmatprep.subr.bf16.mxu0 0
  %1617 = vmatpush1.bf16.msra.mxu0 0
  %1618 = vmatprep.subr.bf16.mxu0 0
  %1619 = vmatpush1.bf16.msra.mxu0 0
  %1620 = vmatprep.subr.bf16.mxu0 0
  %1621 = vmatpush1.bf16.msra.mxu0 0
  %1622 = vmatprep.subr.bf16.mxu0 0
  %1623 = vmatpush1.bf16.msra.mxu0 0
  %1624 = vmatprep.subr.bf16.mxu0 0
  %1625 = vmatpush1.bf16.msra.mxu0 0
  %1626 = vmatprep.subr.bf16.mxu0 0
  %1627 = vmatpush1.bf16.msra.mxu0 0
  %1628 = vmatprep.subr.bf16.mxu0 0
  %1629 = vmatpush1.bf16.msra.mxu0 0
  %1630 = vmatprep.subr.bf16.mxu0 0
  %1631 = vmatpush1.bf16.msra.mxu0 0
  %1632 = vmatprep.mubr.bf16.mxu0 0
  %1633 = vmatmul.mubr.bf16.gmra.mrb[0].mxu0 %v1599
  %v1634 = vpop.f32.mrb[0].mxu0
  %v1635 = vadd.f32 0.0, %v1634
  %v1636 = vpop.f32.mrb[0].mxu0
  %v1637 = vadd.f32 0.0, %v1636
  %v1638 = vpop.f32.mrb[0].mxu0
  %v1639 = vpop.f32.mrb[0].mxu0
  %1640 = vdwg.mxu0
  %1641 = vmatprep.subr.bf16.mxu0 %v1099
  %1642 = vmatpush1.bf16.msra.mxu0 %v1098
  %1643 = vmatprep.subr.bf16.mxu0 %v1103
  %1644 = vmatpush1.bf16.msra.mxu0 %v1102
  %1645 = vmatprep.subr.bf16.mxu0 %v1107
  %1646 = vmatpush1.bf16.msra.mxu0 %v1106
  %1647 = vmatprep.subr.bf16.mxu0 %v1111
  %1648 = vmatpush1.bf16.msra.mxu0 %v1110
  %1649 = vmatprep.subr.bf16.mxu0 %v1115
  %1650 = vmatpush1.bf16.msra.mxu0 %v1114
  %1651 = vmatprep.subr.bf16.mxu0 %v1119
  %1652 = vmatpush1.bf16.msra.mxu0 %v1118
  %1653 = vmatprep.subr.bf16.mxu0 %v1123
  %1654 = vmatpush1.bf16.msra.mxu0 %v1122
  %1655 = vmatprep.subr.bf16.mxu0 %v1127
  %1656 = vmatpush1.bf16.msra.mxu0 %v1126
  %1657 = vmatprep.subr.bf16.mxu0 0
  %1658 = vmatpush1.bf16.msra.mxu0 0
  %1659 = vmatprep.subr.bf16.mxu0 0
  %1660 = vmatpush1.bf16.msra.mxu0 0
  %1661 = vmatprep.subr.bf16.mxu0 0
  %1662 = vmatpush1.bf16.msra.mxu0 0
  %1663 = vmatprep.subr.bf16.mxu0 0
  %1664 = vmatpush1.bf16.msra.mxu0 0
  %1665 = vmatprep.subr.bf16.mxu0 0
  %1666 = vmatpush1.bf16.msra.mxu0 0
  %1667 = vmatprep.subr.bf16.mxu0 0
  %1668 = vmatpush1.bf16.msra.mxu0 0
  %1669 = vmatprep.subr.bf16.mxu0 0
  %1670 = vmatpush1.bf16.msra.mxu0 0
  %1671 = vmatprep.subr.bf16.mxu0 0
  %1672 = vmatpush1.bf16.msra.mxu0 0
  %1673 = vmatprep.mubr.bf16.mxu0 0
  %1674 = vmatmul.mubr.bf16.gmra.mrb[0].mxu0 %v1599
  %v1675 = vpop.f32.mrb[0].mxu0
  %v1676 = vadd.f32 0.0, %v1675
  %v1677 = vpop.f32.mrb[0].mxu0
  %v1678 = vadd.f32 0.0, %v1677
  %v1679 = vpop.f32.mrb[0].mxu0
  %v1680 = vpop.f32.mrb[0].mxu0
  %1681 = vdwg.mxu0
  %v1682 = vadd.f32 %v1595, %v1635
  %v1683 = vadd.f32 %v1596, %v1637
  %v1684 = vadd.f32 %v1597, %v1676
  %v1685 = vadd.f32 %v1598, %v1678
  %v1686 = vmul.f32 %v1682, 0.5
  %v1687 = vtanh.pop %v1686
  %v1688 = vmul.f32 %v1687, 0.5
  %v1689 = vadd.f32 %v1688, 0.5
  %v1690 = vmul.f32 %v1683, 0.5
  %v1691 = vtanh.pop %v1690
  %v1692 = vmul.f32 %v1691, 0.5
  %v1693 = vadd.f32 %v1692, 0.5
  %v1694 = vtanh.pop %v1684
  %v1695 = vmul.f32 %v1685, 0.5
  %v1696 = vtanh.pop %v1695
  %v1697 = vmul.f32 %v1696, 0.5
  %v1698 = vadd.f32 %v1697, 0.5
  %v1699 = vmul.f32 %v1693, %v1591
  %v1700 = vmul.f32 %v1689, %v1694
  %v1701 = vadd.f32 %v1699, %v1700
  %v1702 = vtanh.pop %v1701
  %v1703 = vmul.f32 %v1698, %v1702
  %1704 = vst [vmem:[#allocation3 + $0x20] sm:$0xff] %v1703
  %v1705 = vld [vmem:[#allocation2 + $0xa0] sm:$0xff]
  %v1706 = vld [vmem:[#allocation2 + $0xa8] sm:$0xff]
  %v1707 = vld [vmem:[#allocation2 + $0xb0] sm:$0xff]
  %v1708 = vld [vmem:[#allocation2 + $0xb8] sm:$0xff]
  %v1709 = vpack.c.bf16 %v1703, %v1703
  %1710 = vmatprep.subr.bf16.mxu0 %v1097
  %1711 = vmatpush1.bf16.msra.mxu0 %v1096
  %1712 = vmatprep.subr.bf16.mxu0 %v1101
  %1713 = vmatpush1.bf16.msra.mxu0 %v1100
  %1714 = vmatprep.subr.bf16.mxu0 %v1105
  %1715 = vmatpush1.bf16.msra.mxu0 %v1104
  %1716 = vmatprep.subr.bf16.mxu0 %v1109
  %1717 = vmatpush1.bf16.msra.mxu0 %v1108
  %1718 = vmatprep.subr.bf16.mxu0 %v1113
  %1719 = vmatpush1.bf16.msra.mxu0 %v1112
  %1720 = vmatprep.subr.bf16.mxu0 %v1117
  %1721 = vmatpush1.bf16.msra.mxu0 %v1116
  %1722 = vmatprep.subr.bf16.mxu0 %v1121
  %1723 = vmatpush1.bf16.msra.mxu0 %v1120
  %1724 = vmatprep.subr.bf16.mxu0 %v1125
  %1725 = vmatpush1.bf16.msra.mxu0 %v1124
  %1726 = vmatprep.subr.bf16.mxu0 0
  %1727 = vmatpush1.bf16.msra.mxu0 0
  %1728 = vmatprep.subr.bf16.mxu0 0
  %1729 = vmatpush1.bf16.msra.mxu0 0
  %1730 = vmatprep.subr.bf16.mxu0 0
  %1731 = vmatpush1.bf16.msra.mxu0 0
  %1732 = vmatprep.subr.bf16.mxu0 0
  %1733 = vmatpush1.bf16.msra.mxu0 0
  %1734 = vmatprep.subr.bf16.mxu0 0
  %1735 = vmatpush1.bf16.msra.mxu0 0
  %1736 = vmatprep.subr.bf16.mxu0 0
  %1737 = vmatpush1.bf16.msra.mxu0 0
  %1738 = vmatprep.subr.bf16.mxu0 0
  %1739 = vmatpush1.bf16.msra.mxu0 0
  %1740 = vmatprep.subr.bf16.mxu0 0
  %1741 = vmatpush1.bf16.msra.mxu0 0
  %1742 = vmatprep.mubr.bf16.mxu0 0
  %1743 = vmatmul.mubr.bf16.gmra.mrb[0].mxu0 %v1709
  %v1744 = vpop.f32.mrb[0].mxu0
  %v1745 = vadd.f32 0.0, %v1744
  %v1746 = vpop.f32.mrb[0].mxu0
  %v1747 = vadd.f32 0.0, %v1746
  %v1748 = vpop.f32.mrb[0].mxu0
  %v1749 = vpop.f32.mrb[0].mxu0
  %1750 = vdwg.mxu0
  %1751 = vmatprep.subr.bf16.mxu0 %v1099
  %1752 = vmatpush1.bf16.msra.mxu0 %v1098
  %1753 = vmatprep.subr.bf16.mxu0 %v1103
  %1754 = vmatpush1.bf16.msra.mxu0 %v1102
  %1755 = vmatprep.subr.bf16.mxu0 %v1107
  %1756 = vmatpush1.bf16.msra.mxu0 %v1106
  %1757 = vmatprep.subr.bf16.mxu0 %v1111
  %1758 = vmatpush1.bf16.msra.mxu0 %v1110
  %1759 = vmatprep.subr.bf16.mxu0 %v1115
  %1760 = vmatpush1.bf16.msra.mxu0 %v1114
  %1761 = vmatprep.subr.bf16.mxu0 %v1119
  %1762 = vmatpush1.bf16.msra.mxu0 %v1118
  %1763 = vmatprep.subr.bf16.mxu0 %v1123
  %1764 = vmatpush1.bf16.msra.mxu0 %v1122
  %1765 = vmatprep.subr.bf16.mxu0 %v1127
  %1766 = vmatpush1.bf16.msra.mxu0 %v1126
  %1767 = vmatprep.subr.bf16.mxu0 0
  %1768 = vmatpush1.bf16.msra.mxu0 0
  %1769 = vmatprep.subr.bf16.mxu0 0
  %1770 = vmatpush1.bf16.msra.mxu0 0
  %1771 = vmatprep.subr.bf16.mxu0 0
  %1772 = vmatpush1.bf16.msra.mxu0 0
  %1773 = vmatprep.subr.bf16.mxu0 0
  %1774 = vmatpush1.bf16.msra.mxu0 0
  %1775 = vmatprep.subr.bf16.mxu0 0
  %1776 = vmatpush1.bf16.msra.mxu0 0
  %1777 = vmatprep.subr.bf16.mxu0 0
  %1778 = vmatpush1.bf16.msra.mxu0 0
  %1779 = vmatprep.subr.bf16.mxu0 0
  %1780 = vmatpush1.bf16.msra.mxu0 0
  %1781 = vmatprep.subr.bf16.mxu0 0
  %1782 = vmatpush1.bf16.msra.mxu0 0
  %1783 = vmatprep.mubr.bf16.mxu0 0
  %1784 = vmatmul.mubr.bf16.gmra.mrb[0].mxu0 %v1709
  %v1785 = vpop.f32.mrb[0].mxu0
  %v1786 = vadd.f32 0.0, %v1785
  %v1787 = vpop.f32.mrb[0].mxu0
  %v1788 = vadd.f32 0.0, %v1787
  %v1789 = vpop.f32.mrb[0].mxu0
  %v1790 = vpop.f32.mrb[0].mxu0
  %1791 = vdwg.mxu0
  %v1792 = vadd.f32 %v1705, %v1745
  %v1793 = vadd.f32 %v1706, %v1747
  %v1794 = vadd.f32 %v1707, %v1786
  %v1795 = vadd.f32 %v1708, %v1788
  %v1796 = vmul.f32 %v1792, 0.5
  %v1797 = vtanh.pop %v1796
  %v1798 = vmul.f32 %v1797, 0.5
  %v1799 = vadd.f32 %v1798, 0.5
  %v1800 = vmul.f32 %v1793, 0.5
  %v1801 = vtanh.pop %v1800
  %v1802 = vmul.f32 %v1801, 0.5
  %v1803 = vadd.f32 %v1802, 0.5
  %v1804 = vtanh.pop %v1794
  %v1805 = vmul.f32 %v1795, 0.5
  %v1806 = vtanh.pop %v1805
  %v1807 = vmul.f32 %v1806, 0.5
  %v1808 = vadd.f32 %v1807, 0.5
  %v1809 = vmul.f32 %v1803, %v1701
  %v1810 = vmul.f32 %v1799, %v1804
  %v1811 = vadd.f32 %v1809, %v1810
  %v1812 = vtanh.pop %v1811
  %v1813 = vmul.f32 %v1808, %v1812
  %1814 = vst [vmem:[#allocation3 + $0x28] sm:$0xff] %v1813
  %v1815 = vld [vmem:[#allocation2 + $0xc0] sm:$0xff]
  %v1816 = vld [vmem:[#allocation2 + $0xc8] sm:$0xff]
  %v1817 = vld [vmem:[#allocation2 + $0xd0] sm:$0xff]
  %v1818 = vld [vmem:[#allocation2 + $0xd8] sm:$0xff]
  %v1819 = vpack.c.bf16 %v1813, %v1813
  %1820 = vmatprep.subr.bf16.mxu0 %v1097
  %1821 = vmatpush1.bf16.msra.mxu0 %v1096
  %1822 = vmatprep.subr.bf16.mxu0 %v1101
  %1823 = vmatpush1.bf16.msra.mxu0 %v1100
  %1824 = vmatprep.subr.bf16.mxu0 %v1105
  %1825 = vmatpush1.bf16.msra.mxu0 %v1104
  %1826 = vmatprep.subr.bf16.mxu0 %v1109
  %1827 = vmatpush1.bf16.msra.mxu0 %v1108
  %1828 = vmatprep.subr.bf16.mxu0 %v1113
  %1829 = vmatpush1.bf16.msra.mxu0 %v1112
  %1830 = vmatprep.subr.bf16.mxu0 %v1117
  %1831 = vmatpush1.bf16.msra.mxu0 %v1116
  %1832 = vmatprep.subr.bf16.mxu0 %v1121
  %1833 = vmatpush1.bf16.msra.mxu0 %v1120
  %1834 = vmatprep.subr.bf16.mxu0 %v1125
  %1835 = vmatpush1.bf16.msra.mxu0 %v1124
  %1836 = vmatprep.subr.bf16.mxu0 0
  %1837 = vmatpush1.bf16.msra.mxu0 0
  %1838 = vmatprep.subr.bf16.mxu0 0
  %1839 = vmatpush1.bf16.msra.mxu0 0
  %1840 = vmatprep.subr.bf16.mxu0 0
  %1841 = vmatpush1.bf16.msra.mxu0 0
  %1842 = vmatprep.subr.bf16.mxu0 0
  %1843 = vmatpush1.bf16.msra.mxu0 0
  %1844 = vmatprep.subr.bf16.mxu0 0
  %1845 = vmatpush1.bf16.msra.mxu0 0
  %1846 = vmatprep.subr.bf16.mxu0 0
  %1847 = vmatpush1.bf16.msra.mxu0 0
  %1848 = vmatprep.subr.bf16.mxu0 0
  %1849 = vmatpush1.bf16.msra.mxu0 0
  %1850 = vmatprep.subr.bf16.mxu0 0
  %1851 = vmatpush1.bf16.msra.mxu0 0
  %1852 = vmatprep.mubr.bf16.mxu0 0
  %1853 = vmatmul.mubr.bf16.gmra.mrb[0].mxu0 %v1819
  %v1854 = vpop.f32.mrb[0].mxu0
  %v1855 = vadd.f32 0.0, %v1854
  %v1856 = vpop.f32.mrb[0].mxu0
  %v1857 = vadd.f32 0.0, %v1856
  %v1858 = vpop.f32.mrb[0].mxu0
  %v1859 = vpop.f32.mrb[0].mxu0
  %1860 = vdwg.mxu0
  %1861 = vmatprep.subr.bf16.mxu0 %v1099
  %1862 = vmatpush1.bf16.msra.mxu0 %v1098
  %1863 = vmatprep.subr.bf16.mxu0 %v1103
  %1864 = vmatpush1.bf16.msra.mxu0 %v1102
  %1865 = vmatprep.subr.bf16.mxu0 %v1107
  %1866 = vmatpush1.bf16.msra.mxu0 %v1106
  %1867 = vmatprep.subr.bf16.mxu0 %v1111
  %1868 = vmatpush1.bf16.msra.mxu0 %v1110
  %1869 = vmatprep.subr.bf16.mxu0 %v1115
  %1870 = vmatpush1.bf16.msra.mxu0 %v1114
  %1871 = vmatprep.subr.bf16.mxu0 %v1119
  %1872 = vmatpush1.bf16.msra.mxu0 %v1118
  %1873 = vmatprep.subr.bf16.mxu0 %v1123
  %1874 = vmatpush1.bf16.msra.mxu0 %v1122
  %1875 = vmatprep.subr.bf16.mxu0 %v1127
  %1876 = vmatpush1.bf16.msra.mxu0 %v1126
  %1877 = vmatprep.subr.bf16.mxu0 0
  %1878 = vmatpush1.bf16.msra.mxu0 0
  %1879 = vmatprep.subr.bf16.mxu0 0
  %1880 = vmatpush1.bf16.msra.mxu0 0
  %1881 = vmatprep.subr.bf16.mxu0 0
  %1882 = vmatpush1.bf16.msra.mxu0 0
  %1883 = vmatprep.subr.bf16.mxu0 0
  %1884 = vmatpush1.bf16.msra.mxu0 0
  %1885 = vmatprep.subr.bf16.mxu0 0
  %1886 = vmatpush1.bf16.msra.mxu0 0
  %1887 = vmatprep.subr.bf16.mxu0 0
  %1888 = vmatpush1.bf16.msra.mxu0 0
  %1889 = vmatprep.subr.bf16.mxu0 0
  %1890 = vmatpush1.bf16.msra.mxu0 0
  %1891 = vmatprep.subr.bf16.mxu0 0
  %1892 = vmatpush1.bf16.msra.mxu0 0
  %1893 = vmatprep.mubr.bf16.mxu0 0
  %1894 = vmatmul.mubr.bf16.gmra.mrb[0].mxu0 %v1819
  %v1895 = vpop.f32.mrb[0].mxu0
  %v1896 = vadd.f32 0.0, %v1895
  %v1897 = vpop.f32.mrb[0].mxu0
  %v1898 = vadd.f32 0.0, %v1897
  %v1899 = vpop.f32.mrb[0].mxu0
  %v1900 = vpop.f32.mrb[0].mxu0
  %1901 = vdwg.mxu0
  %v1902 = vadd.f32 %v1815, %v1855
  %v1903 = vadd.f32 %v1816, %v1857
  %v1904 = vadd.f32 %v1817, %v1896
  %v1905 = vadd.f32 %v1818, %v1898
  %v1906 = vmul.f32 %v1902, 0.5
  %v1907 = vtanh.pop %v1906
  %v1908 = vmul.f32 %v1907, 0.5
  %v1909 = vadd.f32 %v1908, 0.5
  %v1910 = vmul.f32 %v1903, 0.5
  %v1911 = vtanh.pop %v1910
  %v1912 = vmul.f32 %v1911, 0.5
  %v1913 = vadd.f32 %v1912, 0.5
  %v1914 = vtanh.pop %v1904
  %v1915 = vmul.f32 %v1905, 0.5
  %v1916 = vtanh.pop %v1915
  %v1917 = vmul.f32 %v1916, 0.5
  %v1918 = vadd.f32 %v1917, 0.5
  %v1919 = vmul.f32 %v1913, %v1811
  %v1920 = vmul.f32 %v1909, %v1914
  %v1921 = vadd.f32 %v1919, %v1920
  %v1922 = vtanh.pop %v1921
  %v1923 = vmul.f32 %v1918, %v1922
  %1924 = vst [vmem:[#allocation3 + $0x30] sm:$0xff] %v1923
  %v1925 = vld [vmem:[#allocation2 + $0xe0] sm:$0xff]
  %v1926 = vld [vmem:[#allocation2 + $0xe8] sm:$0xff]
  %v1927 = vld [vmem:[#allocation2 + $0xf0] sm:$0xff]
  %v1928 = vld [vmem:[#allocation2 + $0xf8] sm:$0xff]
  %v1929 = vpack.c.bf16 %v1923, %v1923
  %1930 = vmatprep.subr.bf16.mxu0 %v1097
  %1931 = vmatpush1.bf16.msra.mxu0 %v1096
  %1932 = vmatprep.subr.bf16.mxu0 %v1101
  %1933 = vmatpush1.bf16.msra.mxu0 %v1100
  %1934 = vmatprep.subr.bf16.mxu0 %v1105
  %1935 = vmatpush1.bf16.msra.mxu0 %v1104
  %1936 = vmatprep.subr.bf16.mxu0 %v1109
  %1937 = vmatpush1.bf16.msra.mxu0 %v1108
  %1938 = vmatprep.subr.bf16.mxu0 %v1113
  %1939 = vmatpush1.bf16.msra.mxu0 %v1112
  %1940 = vmatprep.subr.bf16.mxu0 %v1117
  %1941 = vmatpush1.bf16.msra.mxu0 %v1116
  %1942 = vmatprep.subr.bf16.mxu0 %v1121
  %1943 = vmatpush1.bf16.msra.mxu0 %v1120
  %1944 = vmatprep.subr.bf16.mxu0 %v1125
  %1945 = vmatpush1.bf16.msra.mxu0 %v1124
  %1946 = vmatprep.subr.bf16.mxu0 0
  %1947 = vmatpush1.bf16.msra.mxu0 0
  %1948 = vmatprep.subr.bf16.mxu0 0
  %1949 = vmatpush1.bf16.msra.mxu0 0
  %1950 = vmatprep.subr.bf16.mxu0 0
  %1951 = vmatpush1.bf16.msra.mxu0 0
  %1952 = vmatprep.subr.bf16.mxu0 0
  %1953 = vmatpush1.bf16.msra.mxu0 0
  %1954 = vmatprep.subr.bf16.mxu0 0
  %1955 = vmatpush1.bf16.msra.mxu0 0
  %1956 = vmatprep.subr.bf16.mxu0 0
  %1957 = vmatpush1.bf16.msra.mxu0 0
  %1958 = vmatprep.subr.bf16.mxu0 0
  %1959 = vmatpush1.bf16.msra.mxu0 0
  %1960 = vmatprep.subr.bf16.mxu0 0
  %1961 = vmatpush1.bf16.msra.mxu0 0
  %1962 = vmatprep.mubr.bf16.mxu0 0
  %1963 = vmatmul.mubr.bf16.gmra.mrb[0].mxu0 %v1929
  %v1964 = vpop.f32.mrb[0].mxu0
  %v1965 = vadd.f32 0.0, %v1964
  %v1966 = vpop.f32.mrb[0].mxu0
  %v1967 = vadd.f32 0.0, %v1966
  %v1968 = vpop.f32.mrb[0].mxu0
  %v1969 = vpop.f32.mrb[0].mxu0
  %1970 = vdwg.mxu0
  %1971 = vmatprep.subr.bf16.mxu0 %v1099
  %1972 = vmatpush1.bf16.msra.mxu0 %v1098
  %1973 = vmatprep.subr.bf16.mxu0 %v1103
  %1974 = vmatpush1.bf16.msra.mxu0 %v1102
  %1975 = vmatprep.subr.bf16.mxu0 %v1107
  %1976 = vmatpush1.bf16.msra.mxu0 %v1106
  %1977 = vmatprep.subr.bf16.mxu0 %v1111
  %1978 = vmatpush1.bf16.msra.mxu0 %v1110
  %1979 = vmatprep.subr.bf16.mxu0 %v1115
  %1980 = vmatpush1.bf16.msra.mxu0 %v1114
  %1981 = vmatprep.subr.bf16.mxu0 %v1119
  %1982 = vmatpush1.bf16.msra.mxu0 %v1118
  %1983 = vmatprep.subr.bf16.mxu0 %v1123
  %1984 = vmatpush1.bf16.msra.mxu0 %v1122
  %1985 = vmatprep.subr.bf16.mxu0 %v1127
  %1986 = vmatpush1.bf16.msra.mxu0 %v1126
  %1987 = vmatprep.subr.bf16.mxu0 0
  %1988 = vmatpush1.bf16.msra.mxu0 0
  %1989 = vmatprep.subr.bf16.mxu0 0
  %1990 = vmatpush1.bf16.msra.mxu0 0
  %1991 = vmatprep.subr.bf16.mxu0 0
  %1992 = vmatpush1.bf16.msra.mxu0 0
  %1993 = vmatprep.subr.bf16.mxu0 0
  %1994 = vmatpush1.bf16.msra.mxu0 0
  %1995 = vmatprep.subr.bf16.mxu0 0
  %1996 = vmatpush1.bf16.msra.mxu0 0
  %1997 = vmatprep.subr.bf16.mxu0 0
  %1998 = vmatpush1.bf16.msra.mxu0 0
  %1999 = vmatprep.subr.bf16.mxu0 0
  %2000 = vmatpush1.bf16.msra.mxu0 0
  %2001 = vmatprep.subr.bf16.mxu0 0
  %2002 = vmatpush1.bf16.msra.mxu0 0
  %2003 = vmatprep.mubr.bf16.mxu0 0
  %2004 = vmatmul.mubr.bf16.gmra.mrb[0].mxu0 %v1929
  %v2005 = vpop.f32.mrb[0].mxu0
  %v2006 = vadd.f32 0.0, %v2005
  %v2007 = vpop.f32.mrb[0].mxu0
  %v2008 = vadd.f32 0.0, %v2007
  %v2009 = vpop.f32.mrb[0].mxu0
  %v2010 = vpop.f32.mrb[0].mxu0
  %2011 = vdwg.mxu0
  %v2012 = vadd.f32 %v1925, %v1965
  %v2013 = vadd.f32 %v1926, %v1967
  %v2014 = vadd.f32 %v1927, %v2006
  %v2015 = vadd.f32 %v1928, %v2008
  %v2016 = vmul.f32 %v2012, 0.5
  %v2017 = vtanh.pop %v2016
  %v2018 = vmul.f32 %v2017, 0.5
  %v2019 = vadd.f32 %v2018, 0.5
  %v2020 = vmul.f32 %v2013, 0.5
  %v2021 = vtanh.pop %v2020
  %v2022 = vmul.f32 %v2021, 0.5
  %v2023 = vadd.f32 %v2022, 0.5
  %v2024 = vtanh.pop %v2014
  %v2025 = vmul.f32 %v2015, 0.5
  %v2026 = vtanh.pop %v2025
  %v2027 = vmul.f32 %v2026, 0.5
  %v2028 = vadd.f32 %v2027, 0.5
  %v2029 = vmul.f32 %v2023, %v1921
  %v2030 = vmul.f32 %v2019, %v2024
  %v2031 = vadd.f32 %v2029, %v2030
  %v2032 = vtanh.pop %v2031
  %v2033 = vmul.f32 %v2028, %v2032
  %2034 = vst [vmem:[#allocation3 + $0x38] sm:$0xff] %v2033
  %v2035 = vld [vmem:[#allocation3] sm:$0xff]
  %v2036 = vld [vmem:[#allocation3 + $0x8] sm:$0xff]
  %v2037 = vld [vmem:[#allocation3 + $0x10] sm:$0xff]
  %v2038 = vld [vmem:[#allocation3 + $0x18] sm:$0xff]
  %v2039 = vld [vmem:[#allocation3 + $0x20] sm:$0xff]
  %v2040 = vld [vmem:[#allocation3 + $0x28] sm:$0xff]
  %v2041 = vld [vmem:[#allocation3 + $0x30] sm:$0xff]
  %v2042 = vld [vmem:[#allocation3 + $0x38] sm:$0xff]
  %v2043 = vld [vmem:[%s2] sm:$0xff]
  %v2044 = vld [vmem:[%s2 + $0x8] sm:$0xff]
  %v2045 = vld [vmem:[%s2 + $0x10] sm:$0xff]
  %v2046 = vld [vmem:[%s2 + $0x18] sm:$0xff]
  %v2047 = vld [vmem:[%s2 + $0x20] sm:$0xff]
  %v2048 = vld [vmem:[%s2 + $0x28] sm:$0xff]
  %v2049 = vld [vmem:[%s2 + $0x30] sm:$0xff]
  %v2050 = vld [vmem:[%s2 + $0x38] sm:$0xff]
  %v2051 = vmul.f32 %v2035, %v2043
  %v2052 = vmul.f32 %v2036, %v2044
  %v2053 = vmul.f32 %v2037, %v2045
  %v2054 = vmul.f32 %v2038, %v2046
  %v2055 = vmul.f32 %v2039, %v2047
  %v2056 = vmul.f32 %v2040, %v2048
  %v2057 = vmul.f32 %v2041, %v2049
  %v2058 = vmul.f32 %v2042, %v2050
  %v2059 = vpack.c.bf16 %v2052, %v2051
  %v2060 = vpack.c.bf16 %v2054, %v2053
  %v2061 = vpack.c.bf16 %v2056, %v2055
  %v2062 = vpack.c.bf16 %v2058, %v2057
  %v2063 = vld [vmem:[%s6] sm:$0xff]
  %v2064 = vld [vmem:[%s6 + $0x8] sm:$0xff]
  %v2065 = vld [vmem:[%s6 + $0x10] sm:$0xff]
  %v2066 = vld [vmem:[%s6 + $0x18] sm:$0xff]
  %v2067 = vld [vmem:[%s6 + $0x20] sm:$0xff]
  %v2068 = vld [vmem:[%s6 + $0x28] sm:$0xff]
  %v2069 = vld [vmem:[%s6 + $0x30] sm:$0xff]
  %v2070 = vld [vmem:[%s6 + $0x38] sm:$0xff]
  %v2071 = vld [vmem:[%s6 + $0x40] sm:$0xff]
  %v2072 = vld [vmem:[%s6 + $0x48] sm:$0xff]
  %v2073 = vld [vmem:[%s6 + $0x50] sm:$0xff]
  %v2074 = vld [vmem:[%s6 + $0x58] sm:$0xff]
  %v2075 = vld [vmem:[%s6 + $0x60] sm:$0xff]
  %v2076 = vld [vmem:[%s6 + $0x68] sm:$0xff]
  %v2077 = vld [vmem:[%s6 + $0x70] sm:$0xff]
  %v2078 = vld [vmem:[%s6 + $0x78] sm:$0xff]
  %v2079 = vld [vmem:[%s5 + $0x4] sm:$0x3]
  %v2081 = vlaneseq
  %v2082 = vshrl.u32 %v2081, 7
  %v2083 = vsub.s32 0, %v2082
  %v2084 = vrot.slane %v2079, %v2083
  %v2085 = vlaneseq
  %v2086 = vshrl.u32 %v2085, 7
  %v2087 = vsub.s32 1, %v2086
  %v2088 = vrot.slane %v2079, %v2087
  %v2107 = vunpack.c.l.b16 %v2063
  %v2108 = vunpack.c.h.b16 %v2063
  %v2109 = vunpack.c.l.b16 %v2064
  %v2110 = vunpack.c.h.b16 %v2064
  %v2111 = vunpack.c.l.b16 %v2065
  %v2112 = vunpack.c.h.b16 %v2065
  %v2113 = vunpack.c.l.b16 %v2066
  %v2114 = vunpack.c.h.b16 %v2066
  %v2115 = vunpack.c.l.b16 %v2067
  %v2116 = vunpack.c.h.b16 %v2067
  %v2117 = vunpack.c.l.b16 %v2068
  %v2118 = vunpack.c.h.b16 %v2068
  %v2119 = vunpack.c.l.b16 %v2069
  %v2120 = vunpack.c.h.b16 %v2069
  %v2121 = vunpack.c.l.b16 %v2070
  %v2122 = vunpack.c.h.b16 %v2070
  %v2123 = vunpack.c.l.b16 %v2071
  %v2124 = vunpack.c.h.b16 %v2071
  %v2125 = vunpack.c.l.b16 %v2072
  %v2126 = vunpack.c.h.b16 %v2072
  %v2127 = vunpack.c.l.b16 %v2073
  %v2128 = vunpack.c.h.b16 %v2073
  %v2129 = vunpack.c.l.b16 %v2074
  %v2130 = vunpack.c.h.b16 %v2074
  %v2131 = vunpack.c.l.b16 %v2075
  %v2132 = vunpack.c.h.b16 %v2075
  %v2133 = vunpack.c.l.b16 %v2076
  %v2134 = vunpack.c.h.b16 %v2076
  %v2135 = vunpack.c.l.b16 %v2077
  %v2136 = vunpack.c.h.b16 %v2077
  %v2137 = vunpack.c.l.b16 %v2078
  %v2138 = vunpack.c.h.b16 %v2078
  %v2139 = vpack.c.b16 %v2109, %v2107
  %v2140 = vpack.c.b16 %v2110, %v2108
  %v2141 = vpack.c.b16 %v2113, %v2111
  %v2142 = vpack.c.b16 %v2114, %v2112
  %v2143 = vpack.c.b16 %v2117, %v2115
  %v2144 = vpack.c.b16 %v2118, %v2116
  %v2145 = vpack.c.b16 %v2121, %v2119
  %v2146 = vpack.c.b16 %v2122, %v2120
  %v2147 = vpack.c.b16 %v2125, %v2123
  %v2148 = vpack.c.b16 %v2126, %v2124
  %v2149 = vpack.c.b16 %v2129, %v2127
  %v2150 = vpack.c.b16 %v2130, %v2128
  %v2151 = vpack.c.b16 %v2133, %v2131
  %v2152 = vpack.c.b16 %v2134, %v2132
  %v2153 = vpack.c.b16 %v2137, %v2135
  %v2154 = vpack.c.b16 %v2138, %v2136
  %2171 = vmatprep.subr.bf16.mxu0 %v2140
  %2172 = vmatpush1.bf16.msra.mxu0 %v2139
  %2173 = vmatprep.subr.bf16.mxu0 %v2142
  %2174 = vmatpush1.bf16.msra.mxu0 %v2141
  %2175 = vmatprep.subr.bf16.mxu0 %v2144
  %2176 = vmatpush1.bf16.msra.mxu0 %v2143
  %2177 = vmatprep.subr.bf16.mxu0 %v2146
  %2178 = vmatpush1.bf16.msra.mxu0 %v2145
  %2179 = vmatprep.subr.bf16.mxu0 %v2148
  %2180 = vmatpush1.bf16.msra.mxu0 %v2147
  %2181 = vmatprep.subr.bf16.mxu0 %v2150
  %2182 = vmatpush1.bf16.msra.mxu0 %v2149
  %2183 = vmatprep.subr.bf16.mxu0 %v2152
  %2184 = vmatpush1.bf16.msra.mxu0 %v2151
  %2185 = vmatprep.subr.bf16.mxu0 %v2154
  %2186 = vmatpush1.bf16.msra.mxu0 %v2153
  %2187 = vmatprep.subr.bf16.mxu0 0
  %2188 = vmatpush1.bf16.msra.mxu0 0
  %2189 = vmatprep.subr.bf16.mxu0 0
  %2190 = vmatpush1.bf16.msra.mxu0 0
  %2191 = vmatprep.subr.bf16.mxu0 0
  %2192 = vmatpush1.bf16.msra.mxu0 0
  %2193 = vmatprep.subr.bf16.mxu0 0
  %2194 = vmatpush1.bf16.msra.mxu0 0
  %2195 = vmatprep.subr.bf16.mxu0 0
  %2196 = vmatpush1.bf16.msra.mxu0 0
  %2197 = vmatprep.subr.bf16.mxu0 0
  %2198 = vmatpush1.bf16.msra.mxu0 0
  %2199 = vmatprep.subr.bf16.mxu0 0
  %2200 = vmatpush1.bf16.msra.mxu0 0
  %2201 = vmatprep.subr.bf16.mxu0 0
  %2202 = vmatpush1.bf16.msra.mxu0 0
  %2203 = vmatprep.mubr.bf16.mxu0 0
  %2204 = vmatmul.mubr.bf16.gmra.mrb[0].mxu0 %v2059
  %v2205 = vpop.f32.mrb[0].mxu0
  %v2206 = vadd.f32 %v2084, %v2205
  %v2207 = vpop.f32.mrb[0].mxu0
  %v2208 = vadd.f32 %v2088, %v2207
  %v2209 = vpop.f32.mrb[0].mxu0
  %v2210 = vadd.f32 %v2084, %v2209
  %v2211 = vpop.f32.mrb[0].mxu0
  %v2212 = vadd.f32 %v2088, %v2211
  %2213 = vmatprep.mubr.bf16.mxu0 0
  %2214 = vmatmul.mubr.bf16.gmra.mrb[0].mxu0 %v2060
  %v2215 = vpop.f32.mrb[0].mxu0
  %v2216 = vadd.f32 %v2084, %v2215
  %v2217 = vpop.f32.mrb[0].mxu0
  %v2218 = vadd.f32 %v2088, %v2217
  %v2219 = vpop.f32.mrb[0].mxu0
  %v2220 = vadd.f32 %v2084, %v2219
  %v2221 = vpop.f32.mrb[0].mxu0
  %v2222 = vadd.f32 %v2088, %v2221
  %2223 = vmatprep.mubr.bf16.mxu0 0
  %2224 = vmatmul.mubr.bf16.gmra.mrb[0].mxu0 %v2061
  %v2225 = vpop.f32.mrb[0].mxu0
  %v2226 = vadd.f32 %v2084, %v2225
  %v2227 = vpop.f32.mrb[0].mxu0
  %v2228 = vadd.f32 %v2088, %v2227
  %v2229 = vpop.f32.mrb[0].mxu0
  %v2230 = vadd.f32 %v2084, %v2229
  %v2231 = vpop.f32.mrb[0].mxu0
  %v2232 = vadd.f32 %v2088, %v2231
  %2233 = vmatprep.mubr.bf16.mxu0 0
  %2234 = vmatmul.mubr.bf16.gmra.mrb[0].mxu0 %v2062
  %v2235 = vpop.f32.mrb[0].mxu0
  %v2236 = vadd.f32 %v2084, %v2235
  %v2237 = vpop.f32.mrb[0].mxu0
  %v2238 = vadd.f32 %v2088, %v2237
  %v2239 = vpop.f32.mrb[0].mxu0
  %v2240 = vadd.f32 %v2084, %v2239
  %v2241 = vpop.f32.mrb[0].mxu0
  %v2242 = vadd.f32 %v2088, %v2241
  %2243 = vdwg.mxu0
  %2244 = vst [vmem:[%s7] sm:$0xff] %v2206
  %2245 = vst [vmem:[%s7 + $0x8] sm:$0xff] %v2208
  %2246 = vst [vmem:[%s7 + $0x10] sm:$0xff] %v2210
  %2247 = vst [vmem:[%s7 + $0x18] sm:$0xff] %v2212
  %2248 = vst [vmem:[%s7 + $0x20] sm:$0xff] %v2216
  %2249 = vst [vmem:[%s7 + $0x28] sm:$0xff] %v2218
  %2250 = vst [vmem:[%s7 + $0x30] sm:$0xff] %v2220
  %2251 = vst [vmem:[%s7 + $0x38] sm:$0xff] %v2222
  %2252 = vst [vmem:[%s7 + $0x40] sm:$0xff] %v2226
  %2253 = vst [vmem:[%s7 + $0x48] sm:$0xff] %v2228
  %2254 = vst [vmem:[%s7 + $0x50] sm:$0xff] %v2230
  %2255 = vst [vmem:[%s7 + $0x58] sm:$0xff] %v2232
  %2256 = vst [vmem:[%s7 + $0x60] sm:$0xff] %v2236
  %2257 = vst [vmem:[%s7 + $0x68] sm:$0xff] %v2238
  %2258 = vst [vmem:[%s7 + $0x70] sm:$0xff] %v2240
  %2259 = vst [vmem:[%s7 + $0x78] sm:$0xff] %v2242
  // Predicated region
  $region30: #{word_lstm_forward.1} parent=0 // pred_check
    _
  $region31: #{word_lstm_forward.1} parent=0 // pred_check_branch
    %2261 = sbr.rel (0) target = $region33
  $region32: #{word_lstm_forward.1} parent=0 // pred_region
    _
  $region33: #{word_lstm_forward.1} parent=0 // pred_fallthru
    _
  // Predicated region
  $region34: #{word_lstm_forward.1} parent=0 // pred_check
    _
  $region35: #{word_lstm_forward.1} parent=0 // pred_check_branch
    %2263 = sbr.rel (0) target = $region37
  $region36: #{word_lstm_forward.1} parent=0 // pred_region
    _
  $region37: #{word_lstm_forward.1} parent=0 // pred_fallthru
    _

</llo_original>
